<compile_context>
chip_gen: v7x
topology: tpu7x:2x2x1
jax: 0.10.0
libtpu: 0.0.40
codegen_flags: <defaults>
</compile_context>

<pallas_src>
import functools

import jax
import jax.numpy as jnp
from jax.experimental import pallas as pl
from jax.experimental.pallas import tpu as pltpu


def _round_up(x, m):
    return (x + m - 1) // m * m


def _cdiv(a, b):
    return -(-a // b)


# ----------------------------------------------------------------------------
# Pallas kernel: sequential 1x1-conv MLP over channels + per-layer max over N
# ----------------------------------------------------------------------------
def _cmlp_kernel(x_ref, *refs, num_layers, relu_flags, compute_dtype):
    """x_ref: (tn, C_in) rows of one (batch, split) slice.
    refs = (w0, b0, ..., w_{L-1}, b_{L-1}, o_0, ..., o_{L-1}).
    o_li: (1, 1, C_pad_li) running-max accumulator for this (batch, split)."""
    wb = refs[:2 * num_layers]
    o_refs = refs[2 * num_layers:]
    j = pl.program_id(2)                      # N-chunk index (reduction axis)

    # Single predicated init of all accumulators (padded lanes end up at 0
    # because their weights/bias are 0, and are sliced away in the wrapper).
    @pl.when(j == 0)
    def _init():
        for o_ref in o_refs:
            o_ref[...] = jnp.full(o_ref.shape, -jnp.inf, o_ref.dtype)

    lhs = x_ref[...].astype(compute_dtype)    # bf16 (or f32) MXU lhs
    for li in range(num_layers):
        w_ref, b_ref = wb[2 * li], wb[2 * li + 1]
        # Weights are already in compute_dtype (pre-cast in the wrapper).
        h = jnp.dot(lhs, w_ref[...], preferred_element_type=jnp.float32)
        h = h + b_ref[...]
        if relu_flags[li]:
            h = jnp.maximum(h, 0.0)

        # Per-chunk max over the point axis (f32), accumulated across chunks.
        m = jnp.max(h, axis=0, keepdims=True)             # (1, C_pad)
        o_refs[li][0] = jnp.maximum(o_refs[li][0], m)     # (1, C_pad) view

        if li + 1 < num_layers:
            # Produce next layer's lhs in the epilogue: ends the f32 live range.
            lhs = h.astype(compute_dtype)


# ----------------------------------------------------------------------------
# Wrapper helpers
# ----------------------------------------------------------------------------
def _pad_params_for_lanes(params, compute_dtype, lane=128):
    """Zero-pad out-channels (and the next layer's in-channels) to a multiple
    of `lane`, and pre-cast weights to the compute dtype once. Zero rows/cols
    plus zero bias leave the real channels numerically unchanged."""
    ws, bs = list(params[0::2]), list(params[1::2])
    out_pad = [_round_up(int(w.shape[1]), lane) for w in ws]
    padded = []
    for i, (w, bb) in enumerate(zip(ws, bs)):
        c_in, c_out = w.shape
        in_pad = int(c_in) if i == 0 else out_pad[i - 1]
        w_p = jnp.zeros((in_pad, out_pad[i]), jnp.float32).at[:c_in, :c_out].set(w)
        w_p = w_p.astype(compute_dtype)                   # cast once, not per step
        b_p = jnp.zeros((1, out_pad[i]), jnp.float32).at[:, :c_out].set(
            bb.reshape(1, -1))                            # bias stays f32
        padded += [w_p, b_p]
    return tuple(padded), out_pad


def _vmem_limit_bytes(tn, c_in, out_pad, padded_params, compute_itemsize):
    lane = 128
    in_blk = 2 * tn * _round_up(c_in, lane) * 4                 # 2x input tile (f32)
    w_bytes = 2 * sum(int(p.size) * p.dtype.itemsize for p in padded_params)
    max_cpad = max(out_pad)
    act = tn * max_cpad * (4 + 4 + compute_itemsize)            # h + next h + lhs
    out_b = 2 * sum(8 * cp * 4 for cp in out_pad)               # sublane-padded outs
    est = in_blk + w_bytes + act + out_b + (8 << 20)            # headroom
    return int(min(max(est, 32 << 20), 64 << 20))               # fits v7x physical


# ----------------------------------------------------------------------------
# Wrapper
# ----------------------------------------------------------------------------
def cmlp_forward(points, params, relu_flags, *, tn_max=1024, use_bf16=True):
    """points: [B, C, N]  ->  [B, sum(mlps)]  (CMLP.forward, bn=False).

    params = (w0, b0, w1, b1, ...) with w_i: [in, out], b_i: [1, out].
    """
    # TODO(synk): bn=True -- eval-mode BatchNorm folds into (w, b) here; train-mode
    # batch statistics have no clean single-pass fusion with the streaming max.
    b, c_in, n = points.shape
    c_outs = [int(w.shape[1]) for w in params[0::2]]
    num_layers = len(c_outs)
    assert len(relu_flags) == num_layers

    compute_dtype = jnp.bfloat16 if use_bf16 else jnp.float32
    padded_params, out_pad = _pad_params_for_lanes(params, compute_dtype)
    max_cpad = max(out_pad)

    # ---- N tiling: bound padding waste to < 8 rows per chunk ---------------
    tn_cap = min(int(tn_max), 512) if max_cpad >= 1024 else int(tn_max)
    tn_cap = max(8, _round_up(tn_cap, 8))
    n_chunks = max(1, _cdiv(n, tn_cap))
    per_chunk = _cdiv(n, n_chunks)
    tn = _round_up(per_chunk, 8)          # prefer keeping tn_cap a mult. of 256
    # v7x: split the N axis across the 2 TensorCores when it costs no padding.
    n_splits = 2 if (n_chunks >= 2 and n_chunks % 2 == 0) else 1
    chunks_per_split = n_chunks // n_splits
    n_pad = n_chunks * tn

    x = jnp.transpose(points, (0, 2, 1)).astype(jnp.float32)     # [B, N, C]
    if n_pad != n:
        # Edge replication: duplicated rows never change a max.
        x = jnp.pad(x, ((0, 0), (0, n_pad - n), (0, 0)), mode="edge")
    x_flat = x.reshape(b * n_pad, c_in)          # 2-D, no in-kernel reshape

    kernel = functools.partial(
        _cmlp_kernel, num_layers=num_layers,
        relu_flags=tuple(bool(r) for r in relu_flags),
        compute_dtype=compute_dtype)

    in_specs = [pl.BlockSpec(
        (tn, c_in),
        lambda i, s, j: (i * n_chunks + s * chunks_per_split + j, 0))]
    in_specs += [pl.BlockSpec(p.shape, lambda i, s, j: (0, 0))
                 for p in padded_params]

    out_shape = tuple(jax.ShapeDtypeStruct((b * n_splits, 1, cp), jnp.float32)
                      for cp in out_pad)
    out_specs = [pl.BlockSpec((1, 1, cp), lambda i, s, j: (i * n_splits + s, 0, 0))
                 for cp in out_pad]

    in_dims = [c_in] + out_pad[:-1]
    flops = 2 * b * n_pad * sum(di * do for di, do in zip(in_dims, out_pad))
    bytes_accessed = (int(x_flat.size) * 4
                      + sum(int(p.size) * p.dtype.itemsize for p in padded_params)
                      + b * n_splits * sum(out_pad) * 4)
    vmem_limit = _vmem_limit_bytes(tn, c_in, out_pad, padded_params,
                                   jnp.dtype(compute_dtype).itemsize)

    outs = pl.pallas_call(
        kernel,
        out_shape=out_shape,
        grid_spec=pltpu.PrefetchScalarGridSpec(
            num_scalar_prefetch=0,
            grid=(b, n_splits, chunks_per_split),
            in_specs=in_specs,
            out_specs=out_specs,
        ),
        compiler_params=pltpu.CompilerParams(
            dimension_semantics=("parallel", "parallel", "arbitrary"),
            vmem_limit_bytes=vmem_limit),
        cost_estimate=pl.CostEstimate(flops=flops, transcendentals=0,
                                      bytes_accessed=bytes_accessed),
    )(x_flat, *padded_params)

    # Combine core-split partial maxes and slice the real channels back out.
    pieces = []
    for o, c in zip(outs, c_outs):
        o = o.reshape(b, n_splits, -1)           # [B, splits, C_pad]
        o = jnp.max(o, axis=1)                   # [B, C_pad]
        pieces.append(o[:, :c])
    return jnp.concatenate(pieces, axis=-1)      # [B, sum(mlps)]


# ----------------------------------------------------------------------------
# Pure-JAX reference + init
# ----------------------------------------------------------------------------
def cmlp_ref(points, params, relu_flags):
    x = jnp.transpose(points, (0, 2, 1)).astype(jnp.float32)     # [B, N, C]
    outs = []
    for li in range(len(relu_flags)):
        w, bb = params[2 * li], params[2 * li + 1]
        x = jnp.einsum("bnc,cd->bnd", x, w) + bb
        if relu_flags[li]:
            x = jnp.maximum(x, 0.0)
        outs.append(jnp.max(x, axis=1))                          # max over N
    return jnp.concatenate(outs, axis=-1)


def init_cmlp_params(key, in_channel, mlps):
    """PyTorch Conv2d(k=1) default init: U(-1/sqrt(fan_in), 1/sqrt(fan_in))."""
    dims = [in_channel] + list(mlps)
    params = []
    for i in range(len(mlps)):
        key, kw, kb = jax.random.split(key, 3)
        bound = 1.0 / (dims[i] ** 0.5)
        w = jax.random.uniform(kw, (dims[i], dims[i + 1]), jnp.float32,
                               -bound, bound)
        bb = jax.random.uniform(kb, (1, dims[i + 1]), jnp.float32,
                                -bound, bound)
        params += [w, bb]
    return tuple(params)


if __name__ == "__main__":
    B, IN_CHANNEL, N = 2, 3, 256
    MLPS = [32, 64, 128]
    RELU = [True, True, False]      # bn=False variant of CMLP

    key = jax.random.PRNGKey(0)
    k_x, k_p = jax.random.split(key)
    points = jax.random.normal(k_x, (B, IN_CHANNEL, N), dtype=jnp.float32)
    params = init_cmlp_params(k_p, IN_CHANNEL, MLPS)

    ref = cmlp_ref(points, params, RELU)

    # f32 MXU path, single N chunk, no core split
    out_f32 = cmlp_forward(points, params, RELU, use_bf16=False)
    # bf16 path, 4 chunks -> core split (2) + running-max accumulation (2/split)
    out_bf16 = cmlp_forward(points, params, RELU, tn_max=64, use_bf16=True)
    # ragged N (exercises edge-replication padding of the point axis)
    pts_odd = points[:, :, :250]
    out_odd = cmlp_forward(pts_odd, params, RELU, tn_max=64, use_bf16=False)
    ref_odd = cmlp_ref(pts_odd, params, RELU)

    jax.block_until_ready((out_f32, out_bf16, out_odd))

    assert out_f32.shape == (B, sum(MLPS))
    assert out_bf16.shape == (B, sum(MLPS))
    assert jnp.allclose(out_f32, ref, atol=1e-2, rtol=1e-2)
    assert jnp.allclose(out_bf16, ref, atol=5e-2, rtol=5e-2)
    assert jnp.allclose(out_odd, ref_odd, atol=1e-2, rtol=1e-2)
    print("KERNEL_OK")
</pallas_src>

<mosaic_0001>
module attributes {stable_mosaic.version = 11 : i64} {
  func.func @_cmlp_kernel(%arg0: i32, %arg1: i32, %arg2: i32, %arg3: memref<256x3xf32, #tpu.memory_space<vmem>>, %arg4: memref<3x128xf32, #tpu.memory_space<vmem>>, %arg5: memref<1x128xf32, #tpu.memory_space<vmem>>, %arg6: memref<128x128xf32, #tpu.memory_space<vmem>>, %arg7: memref<1x128xf32, #tpu.memory_space<vmem>>, %arg8: memref<128x128xf32, #tpu.memory_space<vmem>>, %arg9: memref<1x128xf32, #tpu.memory_space<vmem>>, %arg10: memref<1x1x128xf32, #tpu.memory_space<vmem>>, %arg11: memref<1x1x128xf32, #tpu.memory_space<vmem>>, %arg12: memref<1x1x128xf32, #tpu.memory_space<vmem>>) attributes {dimension_semantics = [#tpu.dimension_semantics<parallel>, #tpu.dimension_semantics<parallel>, #tpu.dimension_semantics<arbitrary>], iteration_bounds = array<i64: 2, 1, 1>, scalar_prefetch = 0 : i64, scratch_operands = 0 : i64, tpu.core_type = #tpu.core_type<tc>, window_params = [{transform_indices = @transform_0, window_bounds = array<i64: 256, 3>}, {pipeline_mode = #tpu.pipeline_mode<synchronous>, transform_indices = @transform_1, window_bounds = array<i64: 3, 128>}, {pipeline_mode = #tpu.pipeline_mode<synchronous>, transform_indices = @transform_2, window_bounds = array<i64: 1, 128>}, {pipeline_mode = #tpu.pipeline_mode<synchronous>, transform_indices = @transform_3, window_bounds = array<i64: 128, 128>}, {pipeline_mode = #tpu.pipeline_mode<synchronous>, transform_indices = @transform_4, window_bounds = array<i64: 1, 128>}, {pipeline_mode = #tpu.pipeline_mode<synchronous>, transform_indices = @transform_5, window_bounds = array<i64: 128, 128>}, {pipeline_mode = #tpu.pipeline_mode<synchronous>, transform_indices = @transform_6, window_bounds = array<i64: 1, 128>}, {transform_indices = @transform_7, window_bounds = array<i64: 1, 1, 128>}, {transform_indices = @transform_8, window_bounds = array<i64: 1, 1, 128>}, {transform_indices = @transform_9, window_bounds = array<i64: 1, 1, 128>}]} {
    %c0_i32 = arith.constant 0 : i32
    %0 = arith.cmpi eq, %arg2, %c0_i32 : i32
    %1 = arith.extui %0 : i1 to i32
    %c0_i32_0 = arith.constant 0 : i32
    %2 = arith.cmpi ne, %1, %c0_i32_0 : i32
    scf.if %2 {
      %cst_39 = arith.constant 0xFF800000 : f32
      %47 = vector.broadcast %cst_39 : f32 to vector<1x1x128xf32>
      %c0_40 = arith.constant 0 : index
      %c0_41 = arith.constant 0 : index
      %c0_42 = arith.constant 0 : index
      %48 = vector.load %arg10[%c0_40, %c0_41, %c0_42] : memref<1x1x128xf32, #tpu.memory_space<vmem>>, vector<1x1x128xf32>
      tpu.vector_store %arg10[%c0_40, %c0_41, %c0_42], %47 {strides = array<i32>} : memref<1x1x128xf32, #tpu.memory_space<vmem>>, vector<1x1x128xf32>,
      %cst_43 = arith.constant 0xFF800000 : f32
      %49 = vector.broadcast %cst_43 : f32 to vector<1x1x128xf32>
      %c0_44 = arith.constant 0 : index
      %c0_45 = arith.constant 0 : index
      %c0_46 = arith.constant 0 : index
      %50 = vector.load %arg11[%c0_44, %c0_45, %c0_46] : memref<1x1x128xf32, #tpu.memory_space<vmem>>, vector<1x1x128xf32>
      tpu.vector_store %arg11[%c0_44, %c0_45, %c0_46], %49 {strides = array<i32>} : memref<1x1x128xf32, #tpu.memory_space<vmem>>, vector<1x1x128xf32>,
      %cst_47 = arith.constant 0xFF800000 : f32
      %51 = vector.broadcast %cst_47 : f32 to vector<1x1x128xf32>
      %c0_48 = arith.constant 0 : index
      %c0_49 = arith.constant 0 : index
      %c0_50 = arith.constant 0 : index
      %52 = vector.load %arg12[%c0_48, %c0_49, %c0_50] : memref<1x1x128xf32, #tpu.memory_space<vmem>>, vector<1x1x128xf32>
      tpu.vector_store %arg12[%c0_48, %c0_49, %c0_50], %51 {strides = array<i32>} : memref<1x1x128xf32, #tpu.memory_space<vmem>>, vector<1x1x128xf32>,
    } else {
    }
    %c0 = arith.constant 0 : index
    %c0_1 = arith.constant 0 : index
    %3 = vector.load %arg3[%c0, %c0_1] : memref<256x3xf32, #tpu.memory_space<vmem>>, vector<256x3xf32>
    %c0_2 = arith.constant 0 : index
    %c0_3 = arith.constant 0 : index
    %4 = vector.load %arg4[%c0_2, %c0_3] : memref<3x128xf32, #tpu.memory_space<vmem>>, vector<3x128xf32>
    %cst = arith.constant dense<0.000000e+00> : vector<256x128xf32>
    %5 = tpu.matmul %3, %4, %cst {dimension_numbers = #tpu.dot_dimension_numbers<[1], [0], [0], [1], [0, 0, 1, 1], [], []>} : vector<256x3xf32>, vector<3x128xf32>, vector<256x128xf32> -> vector<256x128xf32>
    %c0_4 = arith.constant 0 : index
    %c0_5 = arith.constant 0 : index
    %6 = vector.load %arg5[%c0_4, %c0_5] : memref<1x128xf32, #tpu.memory_space<vmem>>, vector<1x128xf32>
    %7 = vector.broadcast %6 : vector<1x128xf32> to vector<256x128xf32>
    %8 = arith.addf %5, %7 : vector<256x128xf32>
    %cst_6 = arith.constant 0.000000e+00 : f32
    %9 = vector.broadcast %cst_6 : f32 to vector<256x128xf32>
    %10 = arith.maximumf %8, %9 : vector<256x128xf32>
    %cst_7 = arith.constant dense<0xFF800000> : vector<128xf32>
    %11 = vector.multi_reduction <maximumf>, %10, %cst_7 [0] : vector<256x128xf32> to vector<128xf32>
    %12 = vector.shape_cast %11 : vector<128xf32> to vector<1x128xf32>
    %c0_8 = arith.constant 0 : index
    %c0_9 = arith.constant 0 : index
    %c0_10 = arith.constant 0 : index
    %13 = vector.load %arg10[%c0_8, %c0_9, %c0_10] : memref<1x1x128xf32, #tpu.memory_space<vmem>>, vector<1x1x128xf32>
    %14 = vector.shape_cast %13 : vector<1x1x128xf32> to vector<1x128xf32>
    %15 = arith.maximumf %14, %12 : vector<1x128xf32>
    %c0_11 = arith.constant 0 : index
    %c0_12 = arith.constant 0 : index
    %c0_13 = arith.constant 0 : index
    %16 = vector.load %arg10[%c0_11, %c0_12, %c0_13] : memref<1x1x128xf32, #tpu.memory_space<vmem>>, vector<1x1x128xf32>
    %17 = vector.shape_cast %16 : vector<1x1x128xf32> to vector<1x128xf32>
    %18 = vector.shape_cast %15 : vector<1x128xf32> to vector<1x1x128xf32>
    tpu.vector_store %arg10[%c0_11, %c0_12, %c0_13], %18 {strides = array<i32>} : memref<1x1x128xf32, #tpu.memory_space<vmem>>, vector<1x1x128xf32>,
    %c0_14 = arith.constant 0 : index
    %c0_15 = arith.constant 0 : index
    %19 = vector.load %arg6[%c0_14, %c0_15] : memref<128x128xf32, #tpu.memory_space<vmem>>, vector<128x128xf32>
    %cst_16 = arith.constant dense<0.000000e+00> : vector<256x128xf32>
    %20 = tpu.matmul %10, %19, %cst_16 {dimension_numbers = #tpu.dot_dimension_numbers<[1], [0], [0], [1], [0, 0, 1, 1], [], []>} : vector<256x128xf32>, vector<128x128xf32>, vector<256x128xf32> -> vector<256x128xf32>
    %c0_17 = arith.constant 0 : index
    %c0_18 = arith.constant 0 : index
    %21 = vector.load %arg7[%c0_17, %c0_18] : memref<1x128xf32, #tpu.memory_space<vmem>>, vector<1x128xf32>
    %22 = vector.broadcast %21 : vector<1x128xf32> to vector<256x128xf32>
    %23 = arith.addf %20, %22 : vector<256x128xf32>
    %cst_19 = arith.constant 0.000000e+00 : f32
    %24 = vector.broadcast %cst_19 : f32 to vector<256x128xf32>
    %25 = arith.maximumf %23, %24 : vector<256x128xf32>
    %cst_20 = arith.constant dense<0xFF800000> : vector<128xf32>
    %26 = vector.multi_reduction <maximumf>, %25, %cst_20 [0] : vector<256x128xf32> to vector<128xf32>
    %27 = vector.shape_cast %26 : vector<128xf32> to vector<1x128xf32>
    %c0_21 = arith.constant 0 : index
    %c0_22 = arith.constant 0 : index
    %c0_23 = arith.constant 0 : index
    %28 = vector.load %arg11[%c0_21, %c0_22, %c0_23] : memref<1x1x128xf32, #tpu.memory_space<vmem>>, vector<1x1x128xf32>
    %29 = vector.shape_cast %28 : vector<1x1x128xf32> to vector<1x128xf32>
    %30 = arith.maximumf %29, %27 : vector<1x128xf32>
    %c0_24 = arith.constant 0 : index
    %c0_25 = arith.constant 0 : index
    %c0_26 = arith.constant 0 : index
    %31 = vector.load %arg11[%c0_24, %c0_25, %c0_26] : memref<1x1x128xf32, #tpu.memory_space<vmem>>, vector<1x1x128xf32>
    %32 = vector.shape_cast %31 : vector<1x1x128xf32> to vector<1x128xf32>
    %33 = vector.shape_cast %30 : vector<1x128xf32> to vector<1x1x128xf32>
    tpu.vector_store %arg11[%c0_24, %c0_25, %c0_26], %33 {strides = array<i32>} : memref<1x1x128xf32, #tpu.memory_space<vmem>>, vector<1x1x128xf32>,
    %c0_27 = arith.constant 0 : index
    %c0_28 = arith.constant 0 : index
    %34 = vector.load %arg8[%c0_27, %c0_28] : memref<128x128xf32, #tpu.memory_space<vmem>>, vector<128x128xf32>
    %cst_29 = arith.constant dense<0.000000e+00> : vector<256x128xf32>
    %35 = tpu.matmul %25, %34, %cst_29 {dimension_numbers = #tpu.dot_dimension_numbers<[1], [0], [0], [1], [0, 0, 1, 1], [], []>} : vector<256x128xf32>, vector<128x128xf32>, vector<256x128xf32> -> vector<256x128xf32>
    %c0_30 = arith.constant 0 : index
    %c0_31 = arith.constant 0 : index
    %36 = vector.load %arg9[%c0_30, %c0_31] : memref<1x128xf32, #tpu.memory_space<vmem>>, vector<1x128xf32>
    %37 = vector.broadcast %36 : vector<1x128xf32> to vector<256x128xf32>
    %38 = arith.addf %35, %37 : vector<256x128xf32>
    %cst_32 = arith.constant dense<0xFF800000> : vector<128xf32>
    %39 = vector.multi_reduction <maximumf>, %38, %cst_32 [0] : vector<256x128xf32> to vector<128xf32>
    %40 = vector.shape_cast %39 : vector<128xf32> to vector<1x128xf32>
    %c0_33 = arith.constant 0 : index
    %c0_34 = arith.constant 0 : index
    %c0_35 = arith.constant 0 : index
    %41 = vector.load %arg12[%c0_33, %c0_34, %c0_35] : memref<1x1x128xf32, #tpu.memory_space<vmem>>, vector<1x1x128xf32>
    %42 = vector.shape_cast %41 : vector<1x1x128xf32> to vector<1x128xf32>
    %43 = arith.maximumf %42, %40 : vector<1x128xf32>
    %c0_36 = arith.constant 0 : index
    %c0_37 = arith.constant 0 : index
    %c0_38 = arith.constant 0 : index
    %44 = vector.load %arg12[%c0_36, %c0_37, %c0_38] : memref<1x1x128xf32, #tpu.memory_space<vmem>>, vector<1x1x128xf32>
    %45 = vector.shape_cast %44 : vector<1x1x128xf32> to vector<1x128xf32>
    %46 = vector.shape_cast %43 : vector<1x128xf32> to vector<1x1x128xf32>
    tpu.vector_store %arg12[%c0_36, %c0_37, %c0_38], %46 {strides = array<i32>} : memref<1x1x128xf32, #tpu.memory_space<vmem>>, vector<1x1x128xf32>,
    return
  }
  func.func @transform_0(%arg0: i32, %arg1: i32, %arg2: i32) -> (i32, i32) {
    %c1_i32 = arith.constant 1 : i32
    %0 = arith.muli %arg0, %c1_i32 : i32
    %c1_i32_0 = arith.constant 1 : i32
    %1 = arith.muli %arg1, %c1_i32_0 : i32
    %2 = arith.addi %0, %1 : i32
    %3 = arith.addi %2, %arg2 : i32
    %c0_i32 = arith.constant 0 : i32
    %c0_i32_1 = arith.constant 0 : i32
    return %3, %c0_i32 : i32, i32
  }
  func.func @transform_1(%arg0: i32, %arg1: i32, %arg2: i32) -> (i32, i32) {
    %c0_i32 = arith.constant 0 : i32
    %c0_i32_0 = arith.constant 0 : i32
    %c0_i32_1 = arith.constant 0 : i32
    return %c0_i32, %c0_i32_0 : i32, i32
  }
  func.func @transform_2(%arg0: i32, %arg1: i32, %arg2: i32) -> (i32, i32) {
    %c0_i32 = arith.constant 0 : i32
    %c0_i32_0 = arith.constant 0 : i32
    %c0_i32_1 = arith.constant 0 : i32
    return %c0_i32, %c0_i32_0 : i32, i32
  }
  func.func @transform_3(%arg0: i32, %arg1: i32, %arg2: i32) -> (i32, i32) {
    %c0_i32 = arith.constant 0 : i32
    %c0_i32_0 = arith.constant 0 : i32
    %c0_i32_1 = arith.constant 0 : i32
    return %c0_i32, %c0_i32_0 : i32, i32
  }
  func.func @transform_4(%arg0: i32, %arg1: i32, %arg2: i32) -> (i32, i32) {
    %c0_i32 = arith.constant 0 : i32
    %c0_i32_0 = arith.constant 0 : i32
    %c0_i32_1 = arith.constant 0 : i32
    return %c0_i32, %c0_i32_0 : i32, i32
  }
  func.func @transform_5(%arg0: i32, %arg1: i32, %arg2: i32) -> (i32, i32) {
    %c0_i32 = arith.constant 0 : i32
    %c0_i32_0 = arith.constant 0 : i32
    %c0_i32_1 = arith.constant 0 : i32
    return %c0_i32, %c0_i32_0 : i32, i32
  }
  func.func @transform_6(%arg0: i32, %arg1: i32, %arg2: i32) -> (i32, i32) {
    %c0_i32 = arith.constant 0 : i32
    %c0_i32_0 = arith.constant 0 : i32
    %c0_i32_1 = arith.constant 0 : i32
    return %c0_i32, %c0_i32_0 : i32, i32
  }
  func.func @transform_7(%arg0: i32, %arg1: i32, %arg2: i32) -> (i32, i32, i32) {
    %c1_i32 = arith.constant 1 : i32
    %0 = arith.muli %arg0, %c1_i32 : i32
    %1 = arith.addi %0, %arg1 : i32
    %c0_i32 = arith.constant 0 : i32
    %c0_i32_0 = arith.constant 0 : i32
    %c0_i32_1 = arith.constant 0 : i32
    return %1, %c0_i32, %c0_i32_0 : i32, i32, i32
  }
  func.func @transform_8(%arg0: i32, %arg1: i32, %arg2: i32) -> (i32, i32, i32) {
    %c1_i32 = arith.constant 1 : i32
    %0 = arith.muli %arg0, %c1_i32 : i32
    %1 = arith.addi %0, %arg1 : i32
    %c0_i32 = arith.constant 0 : i32
    %c0_i32_0 = arith.constant 0 : i32
    %c0_i32_1 = arith.constant 0 : i32
    return %1, %c0_i32, %c0_i32_0 : i32, i32, i32
  }
  func.func @transform_9(%arg0: i32, %arg1: i32, %arg2: i32) -> (i32, i32, i32) {
    %c1_i32 = arith.constant 1 : i32
    %0 = arith.muli %arg0, %c1_i32 : i32
    %1 = arith.addi %0, %arg1 : i32
    %c0_i32 = arith.constant 0 : i32
    %c0_i32_0 = arith.constant 0 : i32
    %c0_i32_1 = arith.constant 0 : i32
    return %1, %c0_i32, %c0_i32_0 : i32, i32, i32
  }
}

</mosaic_0001>

<llo_original>
// kernel: tpu_custom_call.1
$region0: #{tpu_custom_call.1}
  #allocation0 [shape = 'u32[]', space=smem, size = 0x4, offset = 0x4, fixed_abs, tag = 'smem constant byte address 0x4 - core index']
  #allocation1 [shape = 'u32[144,128]{1,0:T(1,128)}', space=vmem, size = 0x12000, scoped, tag = 'internal scratch']
  %s0 = inlined_call_operand.vmem [shape: f32[512,3], index: 0, kind: input, shape index: {}]
  %s1 = inlined_call_operand.vmem [shape: f32[3,128], index: 1, kind: input, shape index: {}]
  %s2 = inlined_call_operand.vmem [shape: f32[1,128], index: 2, kind: input, shape index: {}]
  %s3 = inlined_call_operand.vmem [shape: f32[128,128], index: 3, kind: input, shape index: {}]
  %s4 = inlined_call_operand.vmem [shape: f32[1,128], index: 4, kind: input, shape index: {}]
  %s5 = inlined_call_operand.vmem [shape: f32[128,128], index: 5, kind: input, shape index: {}]
  %s6 = inlined_call_operand.vmem [shape: f32[1,128], index: 6, kind: input, shape index: {}]
  %s7 = inlined_call_operand.hbm [shape: f32[2,1,128], index: 7, kind: output, shape index: {0}]
  %s8 = inlined_call_operand.hbm [shape: f32[2,1,128], index: 8, kind: output, shape index: {1}]
  %s9 = inlined_call_operand.hbm [shape: f32[2,1,128], index: 9, kind: output, shape index: {2}]
  %10 = xla_tuple %s7, %s8, %s9
  %s11 = sld [smem:[#allocation0]]
  $region81: #{tpu_custom_call.1} parent=0
    _
  %s13 = ssub.s32 1, %s11
  %s14 = scalar_select 0, %s13, %s11
  $region1: #{tpu_custom_call.1} parent=0
    #allocation2 [shape = 'u8[1024]{0}', space=vmem, size = 0x400, scoped, tag = 'output window, operand 0']
    #allocation3 [shape = 's32[2]{0}', space=sflag, size = 0x8, scoped, tag = 'scoped memory for tpu_custom_call.1']
    #allocation4 [shape = 'u8[1024]{0}', space=vmem, size = 0x400, scoped, tag = 'output window, operand 1']
    #allocation5 [shape = 's32[2]{0}', space=sflag, size = 0x8, scoped, tag = 'scoped memory for tpu_custom_call.1']
    #allocation6 [shape = 'u8[1024]{0}', space=vmem, size = 0x400, scoped, tag = 'output window, operand 2']
    %15 = vsyncpa [#allocation3], 0
    %s16 = scalar_lea.sflag [#allocation3], 1
    %17 = vsyncpa %s16, 0
    %18 = vsyncpa [#allocation5], 0
    %s19 = scalar_lea.sflag [#allocation5], 1
    %20 = vsyncpa %s19, 0
    loop: start=0, step=1, limit=4
    $region2: #{tpu_custom_call.1} parent=1 // loop_pre_header
      _
    $region3: #{tpu_custom_call.1} parent=1 // loop_header
      %s22 = sphi 0, %s26
      %p23 = scmp.ge.s32.totalorder %s22, 4
      %s29 = sphi 0, %s48
      %s30 = sphi 0, %s44
      %s31 = sphi 0, %s40
      %s32 = sphi 0, %s29
      %s33 = sphi 0, %s30
      %s34 = sphi 0, %s31
      %s35 = sphi 0, %s32
      %s36 = sphi 0, %s33
      %s37 = sphi 0, %s34
      %s55 = sphi 0, %s57
      %s58 = sphi 0, %s55
      %s59 = sphi 0, %s58
      %s75 = sphi 0, %s59
      %s79 = sphi 0, %s79
      %s81 = sphi 0, %s79
      %s82 = sphi 0, %s81
      %s96 = sphi 0, %s82
      %s100 = sphi 0, %s100
      %s102 = sphi 0, %s100
      %s103 = sphi 0, %s102
      %s117 = sphi 0, %s103
      %s121 = sphi 0, %s121
      %s123 = sphi 0, %s121
      %s124 = sphi 0, %s123
      %s138 = sphi 0, %s124
      %s142 = sphi 0, %s142
      %s144 = sphi 0, %s142
      %s145 = sphi 0, %s144
      %s159 = sphi 0, %s145
      %s163 = sphi 0, %s163
      %s165 = sphi 0, %s163
      %s166 = sphi 0, %s165
      %s180 = sphi 0, %s166
      %s184 = sphi 0, %s184
      %s186 = sphi 0, %s184
      %s187 = sphi 0, %s186
      %s201 = sphi 0, %s187
      %s209 = sphi 0, %s211
      %s212 = sphi 0, %s209
      %s213 = sphi 0, %s212
      %s229 = sphi 0, %s213
      %s237 = sphi 0, %s239
      %s240 = sphi 0, %s237
      %s241 = sphi 0, %s240
      %s257 = sphi 0, %s241
      %s265 = sphi 0, %s267
      %s268 = sphi 0, %s265
      %s269 = sphi 0, %s268
      %s285 = sphi 0, %s269
    $region4: #{tpu_custom_call.1} parent=1 // loop_header_branch
      %25 = sbr.rel (%p23) target = $region8
    $region5: #{tpu_custom_call.1} parent=1 // loop_body
      %s27 = ssub.s32 %s22, 1
      %s28 = ssub.s32 %s22, 2
      %s38 = sadd.s32 1, %s31
      %p39 = scmp.ge.s32.totalorder %s38, 1
      %s40 = scalar_select %p39, 0, %s38
      %s41 = sadd.s32 1, %s30
      %s42 = scalar_select %p39, %s41, %s30
      %p43 = scmp.ge.s32.totalorder %s42, 1
      %s44 = scalar_select %p43, 0, %s42
      %s45 = sadd.s32 1, %s29
      %s46 = scalar_select %p43, %s45, %s29
      %p47 = scmp.ge.s32.totalorder %s46, 2
      %s48 = scalar_select %p47, 0, %s46
      %s49 = sadd.s32 %s29, %s30
      %s50 = sadd.s32 %s49, %s31
      %s51 = sadd.s32 %s48, %s44
      %s52 = sadd.s32 %s51, %s40
      %s53 = ssub.s32 %s50, %s52
      %p54 = scmp.eq.s32.totalorder %s53, 0
      %s56 = sadd.s32 %s55, 1
      %s57 = scalar_select %p54, %s55, %s56
      %p60 = pneg %p54
      %p61 = scmp.eq.s32.totalorder %s22, 1
      %p62 = por %p60, %p61
      %p63 = scmp.ne.s32.totalorder %s55, %s58
      %p64 = scmp.eq.s32.totalorder %s22, 0
      %p65 = por %p63, %p64
      %p66 = scmp.ne.s32.totalorder %s55, %s58
      %p67 = scmp.eq.s32.totalorder %s27, 1
      %p68 = por %p66, %p67
      %p69 = scmp.ne.s32.totalorder %s58, %s59
      %p70 = scmp.eq.s32.totalorder %s27, 0
      %p71 = por %p69, %p70
      %p72 = scmp.ne.s32.totalorder %s58, %s59
      %p73 = scmp.eq.s32.totalorder %s28, 1
      %p74 = por %p72, %p73
      %p76 = scmp.ne.s32.totalorder %s59, %s75
      %p77 = scmp.eq.s32.totalorder %s28, 0
      %p78 = por %p76, %p77
      %s80 = sadd.s32 %s79, 1
      %p83 = scmp.eq.s32.totalorder %s22, 1
      %p84 = scmp.ne.s32.totalorder %s79, %s81
      %p85 = scmp.eq.s32.totalorder %s22, 0
      %p86 = por %p84, %p85
      %p87 = scmp.ne.s32.totalorder %s79, %s81
      %p88 = scmp.eq.s32.totalorder %s27, 1
      %p89 = por %p87, %p88
      %p90 = scmp.ne.s32.totalorder %s81, %s82
      %p91 = scmp.eq.s32.totalorder %s27, 0
      %p92 = por %p90, %p91
      %p93 = scmp.ne.s32.totalorder %s81, %s82
      %p94 = scmp.eq.s32.totalorder %s28, 1
      %p95 = por %p93, %p94
      %p97 = scmp.ne.s32.totalorder %s82, %s96
      %p98 = scmp.eq.s32.totalorder %s28, 0
      %p99 = por %p97, %p98
      %s101 = sadd.s32 %s100, 1
      %p104 = scmp.eq.s32.totalorder %s22, 1
      %p105 = scmp.ne.s32.totalorder %s100, %s102
      %p106 = scmp.eq.s32.totalorder %s22, 0
      %p107 = por %p105, %p106
      %p108 = scmp.ne.s32.totalorder %s100, %s102
      %p109 = scmp.eq.s32.totalorder %s27, 1
      %p110 = por %p108, %p109
      %p111 = scmp.ne.s32.totalorder %s102, %s103
      %p112 = scmp.eq.s32.totalorder %s27, 0
      %p113 = por %p111, %p112
      %p114 = scmp.ne.s32.totalorder %s102, %s103
      %p115 = scmp.eq.s32.totalorder %s28, 1
      %p116 = por %p114, %p115
      %p118 = scmp.ne.s32.totalorder %s103, %s117
      %p119 = scmp.eq.s32.totalorder %s28, 0
      %p120 = por %p118, %p119
      %s122 = sadd.s32 %s121, 1
      %p125 = scmp.eq.s32.totalorder %s22, 1
      %p126 = scmp.ne.s32.totalorder %s121, %s123
      %p127 = scmp.eq.s32.totalorder %s22, 0
      %p128 = por %p126, %p127
      %p129 = scmp.ne.s32.totalorder %s121, %s123
      %p130 = scmp.eq.s32.totalorder %s27, 1
      %p131 = por %p129, %p130
      %p132 = scmp.ne.s32.totalorder %s123, %s124
      %p133 = scmp.eq.s32.totalorder %s27, 0
      %p134 = por %p132, %p133
      %p135 = scmp.ne.s32.totalorder %s123, %s124
      %p136 = scmp.eq.s32.totalorder %s28, 1
      %p137 = por %p135, %p136
      %p139 = scmp.ne.s32.totalorder %s124, %s138
      %p140 = scmp.eq.s32.totalorder %s28, 0
      %p141 = por %p139, %p140
      %s143 = sadd.s32 %s142, 1
      %p146 = scmp.eq.s32.totalorder %s22, 1
      %p147 = scmp.ne.s32.totalorder %s142, %s144
      %p148 = scmp.eq.s32.totalorder %s22, 0
      %p149 = por %p147, %p148
      %p150 = scmp.ne.s32.totalorder %s142, %s144
      %p151 = scmp.eq.s32.totalorder %s27, 1
      %p152 = por %p150, %p151
      %p153 = scmp.ne.s32.totalorder %s144, %s145
      %p154 = scmp.eq.s32.totalorder %s27, 0
      %p155 = por %p153, %p154
      %p156 = scmp.ne.s32.totalorder %s144, %s145
      %p157 = scmp.eq.s32.totalorder %s28, 1
      %p158 = por %p156, %p157
      %p160 = scmp.ne.s32.totalorder %s145, %s159
      %p161 = scmp.eq.s32.totalorder %s28, 0
      %p162 = por %p160, %p161
      %s164 = sadd.s32 %s163, 1
      %p167 = scmp.eq.s32.totalorder %s22, 1
      %p168 = scmp.ne.s32.totalorder %s163, %s165
      %p169 = scmp.eq.s32.totalorder %s22, 0
      %p170 = por %p168, %p169
      %p171 = scmp.ne.s32.totalorder %s163, %s165
      %p172 = scmp.eq.s32.totalorder %s27, 1
      %p173 = por %p171, %p172
      %p174 = scmp.ne.s32.totalorder %s165, %s166
      %p175 = scmp.eq.s32.totalorder %s27, 0
      %p176 = por %p174, %p175
      %p177 = scmp.ne.s32.totalorder %s165, %s166
      %p178 = scmp.eq.s32.totalorder %s28, 1
      %p179 = por %p177, %p178
      %p181 = scmp.ne.s32.totalorder %s166, %s180
      %p182 = scmp.eq.s32.totalorder %s28, 0
      %p183 = por %p181, %p182
      %s185 = sadd.s32 %s184, 1
      %p188 = scmp.eq.s32.totalorder %s22, 1
      %p189 = scmp.ne.s32.totalorder %s184, %s186
      %p190 = scmp.eq.s32.totalorder %s22, 0
      %p191 = por %p189, %p190
      %p192 = scmp.ne.s32.totalorder %s184, %s186
      %p193 = scmp.eq.s32.totalorder %s27, 1
      %p194 = por %p192, %p193
      %p195 = scmp.ne.s32.totalorder %s186, %s187
      %p196 = scmp.eq.s32.totalorder %s27, 0
      %p197 = por %p195, %p196
      %p198 = scmp.ne.s32.totalorder %s186, %s187
      %p199 = scmp.eq.s32.totalorder %s28, 1
      %p200 = por %p198, %p199
      %p202 = scmp.ne.s32.totalorder %s187, %s201
      %p203 = scmp.eq.s32.totalorder %s28, 0
      %p204 = por %p202, %p203
      %s205 = sadd.s32 %s29, %s30
      %s206 = sadd.s32 %s48, %s44
      %s207 = ssub.s32 %s205, %s206
      %p208 = scmp.eq.s32.totalorder %s207, 0
      %s210 = sadd.s32 %s209, 1
      %s211 = scalar_select %p208, %s209, %s210
      %p214 = pneg %p208
      %p215 = scmp.eq.s32.totalorder %s22, 1
      %p216 = por %p214, %p215
      %p217 = scmp.ne.s32.totalorder %s209, %s212
      %p218 = scmp.eq.s32.totalorder %s22, 0
      %p219 = por %p217, %p218
      %p220 = scmp.ne.s32.totalorder %s209, %s212
      %p221 = scmp.eq.s32.totalorder %s27, 1
      %p222 = por %p220, %p221
      %p223 = scmp.ne.s32.totalorder %s212, %s213
      %p224 = scmp.eq.s32.totalorder %s27, 0
      %p225 = por %p223, %p224
      %p226 = scmp.ne.s32.totalorder %s212, %s213
      %p227 = scmp.eq.s32.totalorder %s28, 1
      %p228 = por %p226, %p227
      %p230 = scmp.ne.s32.totalorder %s213, %s229
      %p231 = scmp.eq.s32.totalorder %s28, 0
      %p232 = por %p230, %p231
      %s233 = sadd.s32 %s29, %s30
      %s234 = sadd.s32 %s48, %s44
      %s235 = ssub.s32 %s233, %s234
      %p236 = scmp.eq.s32.totalorder %s235, 0
      %s238 = sadd.s32 %s237, 1
      %s239 = scalar_select %p236, %s237, %s238
      %p242 = pneg %p236
      %p243 = scmp.eq.s32.totalorder %s22, 1
      %p244 = por %p242, %p243
      %p245 = scmp.ne.s32.totalorder %s237, %s240
      %p246 = scmp.eq.s32.totalorder %s22, 0
      %p247 = por %p245, %p246
      %p248 = scmp.ne.s32.totalorder %s237, %s240
      %p249 = scmp.eq.s32.totalorder %s27, 1
      %p250 = por %p248, %p249
      %p251 = scmp.ne.s32.totalorder %s240, %s241
      %p252 = scmp.eq.s32.totalorder %s27, 0
      %p253 = por %p251, %p252
      %p254 = scmp.ne.s32.totalorder %s240, %s241
      %p255 = scmp.eq.s32.totalorder %s28, 1
      %p256 = por %p254, %p255
      %p258 = scmp.ne.s32.totalorder %s241, %s257
      %p259 = scmp.eq.s32.totalorder %s28, 0
      %p260 = por %p258, %p259
      %s261 = sadd.s32 %s29, %s30
      %s262 = sadd.s32 %s48, %s44
      %s263 = ssub.s32 %s261, %s262
      %p264 = scmp.eq.s32.totalorder %s263, 0
      %s266 = sadd.s32 %s265, 1
      %s267 = scalar_select %p264, %s265, %s266
      %p270 = pneg %p264
      %p271 = scmp.eq.s32.totalorder %s22, 1
      %p272 = por %p270, %p271
      %p273 = scmp.ne.s32.totalorder %s265, %s268
      %p274 = scmp.eq.s32.totalorder %s22, 0
      %p275 = por %p273, %p274
      %p276 = scmp.ne.s32.totalorder %s265, %s268
      %p277 = scmp.eq.s32.totalorder %s27, 1
      %p278 = por %p276, %p277
      %p279 = scmp.ne.s32.totalorder %s268, %s269
      %p280 = scmp.eq.s32.totalorder %s27, 0
      %p281 = por %p279, %p280
      %p282 = scmp.ne.s32.totalorder %s268, %s269
      %p283 = scmp.eq.s32.totalorder %s28, 1
      %p284 = por %p282, %p283
      %p286 = scmp.ne.s32.totalorder %s269, %s285
      %p287 = scmp.eq.s32.totalorder %s28, 0
      %p288 = por %p286, %p287
      %p289 = scmp.le.s32.totalorder 1, %s22
      %p290 = scmp.lt.s32.totalorder %s22, 3
      %p291 = pnand %p289, %p290
      %p292 = pneg %p291
      // Predicated region
      $region9: #{tpu_custom_call.1} parent=5 // pred_check
        _
      $region10: #{tpu_custom_call.1} parent=5 // pred_check_branch
        %294 = sbr.rel (%p291) target = $region12
      $region11: #{tpu_custom_call.1} parent=5 // pred_region
        %s295 = ssub.s32 %s22, 1
        // Predicated region
        $region13: #{tpu_custom_call.1} parent=11 // pred_check
          %p296 = pneg %p92
        $region14: #{tpu_custom_call.1} parent=11 // pred_check_branch
          %298 = sbr.rel (%p296) target = $region16
        $region15: #{tpu_custom_call.1} parent=11 // pred_region
          _
        $region16: #{tpu_custom_call.1} parent=11 // pred_fallthru
          _
        // Predicated region
        $region17: #{tpu_custom_call.1} parent=11 // pred_check
          %p299 = pneg %p113
        $region18: #{tpu_custom_call.1} parent=11 // pred_check_branch
          %301 = sbr.rel (%p299) target = $region20
        $region19: #{tpu_custom_call.1} parent=11 // pred_region
          _
        $region20: #{tpu_custom_call.1} parent=11 // pred_fallthru
          _
        // Predicated region
        $region21: #{tpu_custom_call.1} parent=11 // pred_check
          %p302 = pneg %p134
        $region22: #{tpu_custom_call.1} parent=11 // pred_check_branch
          %304 = sbr.rel (%p302) target = $region24
        $region23: #{tpu_custom_call.1} parent=11 // pred_region
          _
        $region24: #{tpu_custom_call.1} parent=11 // pred_fallthru
          _
        // Predicated region
        $region25: #{tpu_custom_call.1} parent=11 // pred_check
          %p305 = pneg %p155
        $region26: #{tpu_custom_call.1} parent=11 // pred_check_branch
          %307 = sbr.rel (%p305) target = $region28
        $region27: #{tpu_custom_call.1} parent=11 // pred_region
          _
        $region28: #{tpu_custom_call.1} parent=11 // pred_fallthru
          _
        // Predicated region
        $region29: #{tpu_custom_call.1} parent=11 // pred_check
          %p308 = pneg %p176
        $region30: #{tpu_custom_call.1} parent=11 // pred_check_branch
          %310 = sbr.rel (%p308) target = $region32
        $region31: #{tpu_custom_call.1} parent=11 // pred_region
          _
        $region32: #{tpu_custom_call.1} parent=11 // pred_fallthru
          _
        // Predicated region
        $region33: #{tpu_custom_call.1} parent=11 // pred_check
          %p311 = pneg %p197
        $region34: #{tpu_custom_call.1} parent=11 // pred_check_branch
          %313 = sbr.rel (%p311) target = $region36
        $region35: #{tpu_custom_call.1} parent=11 // pred_region
          _
        $region36: #{tpu_custom_call.1} parent=11 // pred_fallthru
          _
      $region12: #{tpu_custom_call.1} parent=5 // pred_fallthru
        _
      %p314 = scmp.lt.s32.totalorder %s22, 2
      // Predicated region
      $region37: #{tpu_custom_call.1} parent=5 // pred_check
        %p315 = pneg %p314
      $region38: #{tpu_custom_call.1} parent=5 // pred_check_branch
        %317 = sbr.rel (%p315) target = $region40
      $region39: #{tpu_custom_call.1} parent=5 // pred_region
        // Predicated region
        $region41: #{tpu_custom_call.1} parent=39 // pred_check
          %p318 = pneg %p65
        $region42: #{tpu_custom_call.1} parent=39 // pred_check_branch
          %320 = sbr.rel (%p318) target = $region44
        $region43: #{tpu_custom_call.1} parent=39 // pred_region
          %s321 = sadd.s32 %s29, %s30
          %s322 = sadd.s32 %s321, %s31
          %s323 = smul.u32 32, %s322
          %p324 = scmp.lt.s32.totalorder %s323, 63
          %s325 = scalar_select %p324, %s323, 63
          %s326 = smul.addr %s325, 8
          %s327 = scalar_lea.vmem %s0, %s326
          %s328 = sadd.s32 %s29, %s30
          %s329 = sadd.s32 %s328, %s31
          %s330 = smul.u32 32, %s329
        $region44: #{tpu_custom_call.1} parent=39 // pred_fallthru
          _
      $region40: #{tpu_custom_call.1} parent=5 // pred_fallthru
        _
      %p331 = scmp.le.s32.totalorder 1, %s22
      %p332 = scmp.lt.s32.totalorder %s22, 3
      %p333 = pnand %p331, %p332
      %p334 = pneg %p333
      // Predicated region
      $region45: #{tpu_custom_call.1} parent=5 // pred_check
        _
      $region46: #{tpu_custom_call.1} parent=5 // pred_check_branch
        %336 = sbr.rel (%p333) target = $region48
      $region47: #{tpu_custom_call.1} parent=5 // pred_region
        %s337 = ssub.s32 %s22, 1
        %s338 = sadd.s32 %s32, %s33
        %s339 = sadd.s32 %s338, %s34
        %s340 = smul.u32 32, %s339
        %p341 = scmp.lt.s32.totalorder %s340, 63
        %s342 = scalar_select %p341, %s340, 63
        %s343 = smul.addr %s342, 8
        %s344 = scalar_lea.vmem %s0, %s343
        %p345 = pneg %p71
        %p346 = pneg %p68
        %p347 = pneg %p92
        %p348 = pneg %p89
        %p349 = pneg %p113
        %p350 = pneg %p110
        %p351 = pneg %p134
        %p352 = pneg %p131
        %p353 = pneg %p155
        %p354 = pneg %p152
        %p355 = pneg %p176
        %p356 = pneg %p173
        %p357 = pneg %p197
        %p358 = pneg %p194
        %p359 = pneg %p225
        %p360 = pneg %p222
        %s361 = sand.u32 %s212, 1
        %s362 = scalar_lea.sflag [#allocation3], %s361
        %s363 = sand.u32 %s212, 1
        %s364 = scalar_lea.vmem [#allocation2], %s363
        %p365 = pneg %p253
        %p366 = pneg %p250
        %s367 = sand.u32 %s27, 1
        %s368 = scalar_lea.sflag [#allocation5], %s367
        %s369 = sand.u32 %s240, 1
        %s370 = scalar_lea.vmem [#allocation4], %s369
        %p371 = pneg %p281
        %p372 = pneg %p278
        %s373 = sand.u32 %s27, 1
        %s374 = scalar_lea.sflag [#allocation5], %s373
        %s375 = sand.u32 %s268, 1
        %s376 = scalar_lea.vmem [#allocation6], %s375
        %s377 = sadd.s32 %s32, %s33
        %s378 = sadd.s32 %s377, %s34
        %s379 = smul.u32 32, %s378
        %p380 = scmp.lt.s32.totalorder %s379, 63
        %s381 = scalar_select %p380, %s379, 63
        %s382 = smul.addr %s381, 8
        %s383 = scalar_lea.vmem %s0, %s382
        %s384 = sadd.s32 %s32, %s33
        %s385 = sadd.s32 %s384, %s34
        %s386 = smul.u32 32, %s385
        %s387 = sadd.s32 %s32, %s33
        %s388 = sadd.s32 %s32, %s33
        %s389 = sadd.s32 %s32, %s33
        %p390 = scmp.eq.s32.totalorder %s34, 0
        // Predicated region
        $region49: #{tpu_custom_call.1} parent=47 // pred_check
          %p391 = pneg %p390
        $region50: #{tpu_custom_call.1} parent=47 // pred_check_branch
          %393 = sbr.rel (%p391) target = $region52
        $region51: #{tpu_custom_call.1} parent=47 // pred_region
          %394 = vst [vmem:[%s364] sm:$0x1] -inf
          %395 = vst [vmem:[%s370] sm:$0x1] -inf
          %396 = vst [vmem:[%s376] sm:$0x1] -inf
        $region52: #{tpu_custom_call.1} parent=47 // pred_fallthru
          _
        %v397 = vld [vmem:[%s383] sm:$0xff]
        %v398 = vld [vmem:[%s383 + $0x8] sm:$0xff]
        %v399 = vld [vmem:[%s383 + $0x10] sm:$0xff]
        %v400 = vld [vmem:[%s383 + $0x18] sm:$0xff]
        %v401 = vld [vmem:[%s383 + $0x20] sm:$0xff]
        %v402 = vld [vmem:[%s383 + $0x28] sm:$0xff]
        %v403 = vld [vmem:[%s383 + $0x30] sm:$0xff]
        %v404 = vld [vmem:[%s383 + $0x38] sm:$0xff]
        %v405 = vld [vmem:[%s383 + $0x40] sm:$0xff]
        %v406 = vld [vmem:[%s383 + $0x48] sm:$0xff]
        %v407 = vld [vmem:[%s383 + $0x50] sm:$0xff]
        %v408 = vld [vmem:[%s383 + $0x58] sm:$0xff]
        %v409 = vld [vmem:[%s383 + $0x60] sm:$0xff]
        %v410 = vld [vmem:[%s383 + $0x68] sm:$0xff]
        %v411 = vld [vmem:[%s383 + $0x70] sm:$0xff]
        %v412 = vld [vmem:[%s383 + $0x78] sm:$0xff]
        %v413 = vld [vmem:[%s383 + $0x80] sm:$0xff]
        %v414 = vld [vmem:[%s383 + $0x88] sm:$0xff]
        %v415 = vld [vmem:[%s383 + $0x90] sm:$0xff]
        %v416 = vld [vmem:[%s383 + $0x98] sm:$0xff]
        %v417 = vld [vmem:[%s383 + $0xa0] sm:$0xff]
        %v418 = vld [vmem:[%s383 + $0xa8] sm:$0xff]
        %v419 = vld [vmem:[%s383 + $0xb0] sm:$0xff]
        %v420 = vld [vmem:[%s383 + $0xb8] sm:$0xff]
        %v421 = vld [vmem:[%s383 + $0xc0] sm:$0xff]
        %v422 = vld [vmem:[%s383 + $0xc8] sm:$0xff]
        %v423 = vld [vmem:[%s383 + $0xd0] sm:$0xff]
        %v424 = vld [vmem:[%s383 + $0xd8] sm:$0xff]
        %v425 = vld [vmem:[%s383 + $0xe0] sm:$0xff]
        %v426 = vld [vmem:[%s383 + $0xe8] sm:$0xff]
        %v427 = vld [vmem:[%s383 + $0xf0] sm:$0xff]
        %v428 = vld [vmem:[%s383 + $0xf8] sm:$0xff]
        %v429 = vld [vmem:[%s1] sm:$0x7]
        %v430 = vld [vmem:[%s2] sm:$0x1]
        %v432 = vlaneseq
        %v433 = vshrl.u32 %v432, 7
        %v434 = vsub.s32 0, %v433
        %v435 = vrot.slane %v430, %v434
        %vm437 = vcmask 23552
        %v439 = vsel %vm437, %v397, 0
        %v442 = vsel %vm437, %v398, 0
        %v445 = vsel %vm437, %v399, 0
        %v448 = vsel %vm437, %v400, 0
        %v451 = vsel %vm437, %v401, 0
        %v454 = vsel %vm437, %v402, 0
        %v457 = vsel %vm437, %v403, 0
        %v460 = vsel %vm437, %v404, 0
        %v463 = vsel %vm437, %v405, 0
        %v466 = vsel %vm437, %v406, 0
        %v469 = vsel %vm437, %v407, 0
        %v472 = vsel %vm437, %v408, 0
        %v475 = vsel %vm437, %v409, 0
        %v478 = vsel %vm437, %v410, 0
        %v481 = vsel %vm437, %v411, 0
        %v484 = vsel %vm437, %v412, 0
        %v487 = vsel %vm437, %v413, 0
        %v490 = vsel %vm437, %v414, 0
        %v493 = vsel %vm437, %v415, 0
        %v496 = vsel %vm437, %v416, 0
        %v499 = vsel %vm437, %v417, 0
        %v502 = vsel %vm437, %v418, 0
        %v505 = vsel %vm437, %v419, 0
        %v508 = vsel %vm437, %v420, 0
        %v511 = vsel %vm437, %v421, 0
        %v514 = vsel %vm437, %v422, 0
        %v517 = vsel %vm437, %v423, 0
        %v520 = vsel %vm437, %v424, 0
        %v523 = vsel %vm437, %v425, 0
        %v526 = vsel %vm437, %v426, 0
        %v529 = vsel %vm437, %v427, 0
        %v532 = vsel %vm437, %v428, 0
        %vm534 = vcmask 1042432
        %v536 = vsel %vm534, %v429, 0
        %538 = vmatprep.subr.mxu0 0.0
        %539 = vmatpush1.msra.mxu0 %v536
        %540 = vmatprep.subr.mxu0 0.0
        %541 = vmatpush1.msra.mxu0 0.0
        %542 = vmatprep.subr.mxu0 0.0
        %543 = vmatpush1.msra.mxu0 0.0
        %544 = vmatprep.subr.mxu0 0.0
        %545 = vmatpush1.msra.mxu0 0.0
        %546 = vmatprep.subr.mxu0 0.0
        %547 = vmatpush1.msra.mxu0 0.0
        %548 = vmatprep.subr.mxu0 0.0
        %549 = vmatpush1.msra.mxu0 0.0
        %550 = vmatprep.subr.mxu0 0.0
        %551 = vmatpush1.msra.mxu0 0.0
        %552 = vmatprep.subr.mxu0 0.0
        %553 = vmatpush1.msra.mxu0 0.0
        %554 = vmatprep.subr.mxu0 0.0
        %555 = vmatpush1.msra.mxu0 0.0
        %556 = vmatprep.subr.mxu0 0.0
        %557 = vmatpush1.msra.mxu0 0.0
        %558 = vmatprep.subr.mxu0 0.0
        %559 = vmatpush1.msra.mxu0 0.0
        %560 = vmatprep.subr.mxu0 0.0
        %561 = vmatpush1.msra.mxu0 0.0
        %562 = vmatprep.subr.mxu0 0.0
        %563 = vmatpush1.msra.mxu0 0.0
        %564 = vmatprep.subr.mxu0 0.0
        %565 = vmatpush1.msra.mxu0 0.0
        %566 = vmatprep.subr.mxu0 0.0
        %567 = vmatpush1.msra.mxu0 0.0
        %568 = vmatprep.subr.mxu0 0.0
        %569 = vmatpush1.msra.mxu0 0.0
        %570 = vmatprep.subr.mxu0 0.0
        %571 = vmatpush1.msra.mxu0 0.0
        %572 = vmatprep.subr.mxu0 0.0
        %573 = vmatpush1.msra.mxu0 0.0
        %574 = vmatprep.subr.mxu0 0.0
        %575 = vmatpush1.msra.mxu0 0.0
        %576 = vmatprep.subr.mxu0 0.0
        %577 = vmatpush1.msra.mxu0 0.0
        %578 = vmatprep.subr.mxu0 0.0
        %579 = vmatpush1.msra.mxu0 0.0
        %580 = vmatprep.subr.mxu0 0.0
        %581 = vmatpush1.msra.mxu0 0.0
        %582 = vmatprep.subr.mxu0 0.0
        %583 = vmatpush1.msra.mxu0 0.0
        %584 = vmatprep.subr.mxu0 0.0
        %585 = vmatpush1.msra.mxu0 0.0
        %586 = vmatprep.subr.mxu0 0.0
        %587 = vmatpush1.msra.mxu0 0.0
        %588 = vmatprep.subr.mxu0 0.0
        %589 = vmatpush1.msra.mxu0 0.0
        %590 = vmatprep.subr.mxu0 0.0
        %591 = vmatpush1.msra.mxu0 0.0
        %592 = vmatprep.subr.mxu0 0.0
        %593 = vmatpush1.msra.mxu0 0.0
        %594 = vmatprep.subr.mxu0 0.0
        %595 = vmatpush1.msra.mxu0 0.0
        %596 = vmatprep.subr.mxu0 0.0
        %597 = vmatpush1.msra.mxu0 0.0
        %598 = vmatprep.subr.mxu0 0.0
        %599 = vmatpush1.msra.mxu0 0.0
        %600 = vmatprep.subr.mxu0 0.0
        %601 = vmatpush1.msra.mxu0 0.0
        %602 = vmatprep.mubr.f32.mxu0 0.0
        %603 = vmatmul.mubr.f32.gmra.mrb[0].mxu0 %v439
        %v604 = vpop.f32.mrb[0].mxu0
        %v605 = vadd.f32 %v435, %v604
        %v606 = vpop.f32.mrb[0].mxu0
        %607 = vmatprep.mubr.f32.mxu0 0.0
        %608 = vmatmul.mubr.f32.gmra.mrb[0].mxu0 %v442
        %v609 = vpop.f32.mrb[0].mxu0
        %v610 = vadd.f32 %v435, %v609
        %v611 = vpop.f32.mrb[0].mxu0
        %612 = vmatprep.mubr.f32.mxu0 0.0
        %613 = vmatmul.mubr.f32.gmra.mrb[0].mxu0 %v445
        %v614 = vpop.f32.mrb[0].mxu0
        %v615 = vadd.f32 %v435, %v614
        %v616 = vpop.f32.mrb[0].mxu0
        %617 = vmatprep.mubr.f32.mxu0 0.0
        %618 = vmatmul.mubr.f32.gmra.mrb[0].mxu0 %v448
        %v619 = vpop.f32.mrb[0].mxu0
        %v620 = vadd.f32 %v435, %v619
        %v621 = vpop.f32.mrb[0].mxu0
        %622 = vmatprep.mubr.f32.mxu0 0.0
        %623 = vmatmul.mubr.f32.gmra.mrb[0].mxu0 %v451
        %v624 = vpop.f32.mrb[0].mxu0
        %v625 = vadd.f32 %v435, %v624
        %v626 = vpop.f32.mrb[0].mxu0
        %627 = vmatprep.mubr.f32.mxu0 0.0
        %628 = vmatmul.mubr.f32.gmra.mrb[0].mxu0 %v454
        %v629 = vpop.f32.mrb[0].mxu0
        %v630 = vadd.f32 %v435, %v629
        %v631 = vpop.f32.mrb[0].mxu0
        %632 = vmatprep.mubr.f32.mxu0 0.0
        %633 = vmatmul.mubr.f32.gmra.mrb[0].mxu0 %v457
        %v634 = vpop.f32.mrb[0].mxu0
        %v635 = vadd.f32 %v435, %v634
        %v636 = vpop.f32.mrb[0].mxu0
        %637 = vmatprep.mubr.f32.mxu0 0.0
        %638 = vmatmul.mubr.f32.gmra.mrb[0].mxu0 %v460
        %v639 = vpop.f32.mrb[0].mxu0
        %v640 = vadd.f32 %v435, %v639
        %v641 = vpop.f32.mrb[0].mxu0
        %642 = vmatprep.mubr.f32.mxu0 0.0
        %643 = vmatmul.mubr.f32.gmra.mrb[0].mxu0 %v463
        %v644 = vpop.f32.mrb[0].mxu0
        %v645 = vadd.f32 %v435, %v644
        %v646 = vpop.f32.mrb[0].mxu0
        %647 = vmatprep.mubr.f32.mxu0 0.0
        %648 = vmatmul.mubr.f32.gmra.mrb[0].mxu0 %v466
        %v649 = vpop.f32.mrb[0].mxu0
        %v650 = vadd.f32 %v435, %v649
        %v651 = vpop.f32.mrb[0].mxu0
        %652 = vmatprep.mubr.f32.mxu0 0.0
        %653 = vmatmul.mubr.f32.gmra.mrb[0].mxu0 %v469
        %v654 = vpop.f32.mrb[0].mxu0
        %v655 = vadd.f32 %v435, %v654
        %v656 = vpop.f32.mrb[0].mxu0
        %657 = vmatprep.mubr.f32.mxu0 0.0
        %658 = vmatmul.mubr.f32.gmra.mrb[0].mxu0 %v472
        %v659 = vpop.f32.mrb[0].mxu0
        %v660 = vadd.f32 %v435, %v659
        %v661 = vpop.f32.mrb[0].mxu0
        %662 = vmatprep.mubr.f32.mxu0 0.0
        %663 = vmatmul.mubr.f32.gmra.mrb[0].mxu0 %v475
        %v664 = vpop.f32.mrb[0].mxu0
        %v665 = vadd.f32 %v435, %v664
        %v666 = vpop.f32.mrb[0].mxu0
        %667 = vmatprep.mubr.f32.mxu0 0.0
        %668 = vmatmul.mubr.f32.gmra.mrb[0].mxu0 %v478
        %v669 = vpop.f32.mrb[0].mxu0
        %v670 = vadd.f32 %v435, %v669
        %v671 = vpop.f32.mrb[0].mxu0
        %672 = vmatprep.mubr.f32.mxu0 0.0
        %673 = vmatmul.mubr.f32.gmra.mrb[0].mxu0 %v481
        %v674 = vpop.f32.mrb[0].mxu0
        %v675 = vadd.f32 %v435, %v674
        %v676 = vpop.f32.mrb[0].mxu0
        %677 = vmatprep.mubr.f32.mxu0 0.0
        %678 = vmatmul.mubr.f32.gmra.mrb[0].mxu0 %v484
        %v679 = vpop.f32.mrb[0].mxu0
        %v680 = vadd.f32 %v435, %v679
        %v681 = vpop.f32.mrb[0].mxu0
        %682 = vmatprep.mubr.f32.mxu0 0.0
        %683 = vmatmul.mubr.f32.gmra.mrb[0].mxu0 %v487
        %v684 = vpop.f32.mrb[0].mxu0
        %v685 = vadd.f32 %v435, %v684
        %v686 = vpop.f32.mrb[0].mxu0
        %687 = vmatprep.mubr.f32.mxu0 0.0
        %688 = vmatmul.mubr.f32.gmra.mrb[0].mxu0 %v490
        %v689 = vpop.f32.mrb[0].mxu0
        %v690 = vadd.f32 %v435, %v689
        %v691 = vpop.f32.mrb[0].mxu0
        %692 = vmatprep.mubr.f32.mxu0 0.0
        %693 = vmatmul.mubr.f32.gmra.mrb[0].mxu0 %v493
        %v694 = vpop.f32.mrb[0].mxu0
        %v695 = vadd.f32 %v435, %v694
        %v696 = vpop.f32.mrb[0].mxu0
        %697 = vmatprep.mubr.f32.mxu0 0.0
        %698 = vmatmul.mubr.f32.gmra.mrb[0].mxu0 %v496
        %v699 = vpop.f32.mrb[0].mxu0
        %v700 = vadd.f32 %v435, %v699
        %v701 = vpop.f32.mrb[0].mxu0
        %702 = vmatprep.mubr.f32.mxu0 0.0
        %703 = vmatmul.mubr.f32.gmra.mrb[0].mxu0 %v499
        %v704 = vpop.f32.mrb[0].mxu0
        %v705 = vadd.f32 %v435, %v704
        %v706 = vpop.f32.mrb[0].mxu0
        %707 = vmatprep.mubr.f32.mxu0 0.0
        %708 = vmatmul.mubr.f32.gmra.mrb[0].mxu0 %v502
        %v709 = vpop.f32.mrb[0].mxu0
        %v710 = vadd.f32 %v435, %v709
        %v711 = vpop.f32.mrb[0].mxu0
        %712 = vmatprep.mubr.f32.mxu0 0.0
        %713 = vmatmul.mubr.f32.gmra.mrb[0].mxu0 %v505
        %v714 = vpop.f32.mrb[0].mxu0
        %v715 = vadd.f32 %v435, %v714
        %v716 = vpop.f32.mrb[0].mxu0
        %717 = vmatprep.mubr.f32.mxu0 0.0
        %718 = vmatmul.mubr.f32.gmra.mrb[0].mxu0 %v508
        %v719 = vpop.f32.mrb[0].mxu0
        %v720 = vadd.f32 %v435, %v719
        %v721 = vpop.f32.mrb[0].mxu0
        %722 = vmatprep.mubr.f32.mxu0 0.0
        %723 = vmatmul.mubr.f32.gmra.mrb[0].mxu0 %v511
        %v724 = vpop.f32.mrb[0].mxu0
        %v725 = vadd.f32 %v435, %v724
        %v726 = vpop.f32.mrb[0].mxu0
        %727 = vmatprep.mubr.f32.mxu0 0.0
        %728 = vmatmul.mubr.f32.gmra.mrb[0].mxu0 %v514
        %v729 = vpop.f32.mrb[0].mxu0
        %v730 = vadd.f32 %v435, %v729
        %v731 = vpop.f32.mrb[0].mxu0
        %732 = vmatprep.mubr.f32.mxu0 0.0
        %733 = vmatmul.mubr.f32.gmra.mrb[0].mxu0 %v517
        %v734 = vpop.f32.mrb[0].mxu0
        %v735 = vadd.f32 %v435, %v734
        %v736 = vpop.f32.mrb[0].mxu0
        %737 = vmatprep.mubr.f32.mxu0 0.0
        %738 = vmatmul.mubr.f32.gmra.mrb[0].mxu0 %v520
        %v739 = vpop.f32.mrb[0].mxu0
        %v740 = vadd.f32 %v435, %v739
        %v741 = vpop.f32.mrb[0].mxu0
        %742 = vmatprep.mubr.f32.mxu0 0.0
        %743 = vmatmul.mubr.f32.gmra.mrb[0].mxu0 %v523
        %v744 = vpop.f32.mrb[0].mxu0
        %v745 = vadd.f32 %v435, %v744
        %v746 = vpop.f32.mrb[0].mxu0
        %747 = vmatprep.mubr.f32.mxu0 0.0
        %748 = vmatmul.mubr.f32.gmra.mrb[0].mxu0 %v526
        %v749 = vpop.f32.mrb[0].mxu0
        %v750 = vadd.f32 %v435, %v749
        %v751 = vpop.f32.mrb[0].mxu0
        %752 = vmatprep.mubr.f32.mxu0 0.0
        %753 = vmatmul.mubr.f32.gmra.mrb[0].mxu0 %v529
        %v754 = vpop.f32.mrb[0].mxu0
        %v755 = vadd.f32 %v435, %v754
        %v756 = vpop.f32.mrb[0].mxu0
        %757 = vmatprep.mubr.f32.mxu0 0.0
        %758 = vmatmul.mubr.f32.gmra.mrb[0].mxu0 %v532
        %v759 = vpop.f32.mrb[0].mxu0
        %v760 = vadd.f32 %v435, %v759
        %v761 = vpop.f32.mrb[0].mxu0
        %762 = vdwg.mxu0
        %v763 = vmax.f32 %v605, 0.0
        %v764 = vmax.f32 %v610, 0.0
        %v765 = vmax.f32 %v615, 0.0
        %v766 = vmax.f32 %v620, 0.0
        %v767 = vmax.f32 %v625, 0.0
        %v768 = vmax.f32 %v630, 0.0
        %v769 = vmax.f32 %v635, 0.0
        %v770 = vmax.f32 %v640, 0.0
        %v771 = vmax.f32 %v645, 0.0
        %v772 = vmax.f32 %v650, 0.0
        %v773 = vmax.f32 %v655, 0.0
        %v774 = vmax.f32 %v660, 0.0
        %v775 = vmax.f32 %v665, 0.0
        %v776 = vmax.f32 %v670, 0.0
        %v777 = vmax.f32 %v675, 0.0
        %v778 = vmax.f32 %v680, 0.0
        %v779 = vmax.f32 %v685, 0.0
        %v780 = vmax.f32 %v690, 0.0
        %v781 = vmax.f32 %v695, 0.0
        %v782 = vmax.f32 %v700, 0.0
        %v783 = vmax.f32 %v705, 0.0
        %v784 = vmax.f32 %v710, 0.0
        %v785 = vmax.f32 %v715, 0.0
        %v786 = vmax.f32 %v720, 0.0
        %v787 = vmax.f32 %v725, 0.0
        %v788 = vmax.f32 %v730, 0.0
        %v789 = vmax.f32 %v735, 0.0
        %v790 = vmax.f32 %v740, 0.0
        %v791 = vmax.f32 %v745, 0.0
        %v792 = vmax.f32 %v750, 0.0
        %v793 = vmax.f32 %v755, 0.0
        %v794 = vmax.f32 %v760, 0.0
        %v795 = vmax.f32 %v763, %v767
        %v796 = vmax.f32 %v764, %v768
        %v797 = vmax.f32 %v765, %v769
        %v798 = vmax.f32 %v766, %v770
        %v799 = vmax.f32 %v795, %v771
        %v800 = vmax.f32 %v796, %v772
        %v801 = vmax.f32 %v797, %v773
        %v802 = vmax.f32 %v798, %v774
        %v803 = vmax.f32 %v799, %v775
        %v804 = vmax.f32 %v800, %v776
        %v805 = vmax.f32 %v801, %v777
        %v806 = vmax.f32 %v802, %v778
        %v807 = vmax.f32 %v803, %v779
        %v808 = vmax.f32 %v804, %v780
        %v809 = vmax.f32 %v805, %v781
        %v810 = vmax.f32 %v806, %v782
        %v811 = vmax.f32 %v807, %v783
        %v812 = vmax.f32 %v808, %v784
        %v813 = vmax.f32 %v809, %v785
        %v814 = vmax.f32 %v810, %v786
        %v815 = vmax.f32 %v811, %v787
        %v816 = vmax.f32 %v812, %v788
        %v817 = vmax.f32 %v813, %v789
        %v818 = vmax.f32 %v814, %v790
        %v819 = vmax.f32 %v815, %v791
        %v820 = vmax.f32 %v816, %v792
        %v821 = vmax.f32 %v817, %v793
        %v822 = vmax.f32 %v818, %v794
        %v823 = vmax.f32 %v819, %v820
        %v824 = vmax.f32 %v821, %v822
        %v825 = vmax.f32 %v823, %v824
        %v826 = vrot.slane %v825, 4
        %v827 = vmax.f32 %v825, %v826
        %v828 = vrot.slane %v827, 2
        %v829 = vmax.f32 %v827, %v828
        %v830 = vrot.slane %v829, 1
        %v831 = vmax.f32 %v829, %v830
        %v832 = vld [vmem:[%s364] sm:$0x1]
        %v833 = vmax.f32 %v832, %v831
        %834 = vst [vmem:[%s364] sm:$0x1] %v833
        %v835 = vld [vmem:[%s3] sm:$0xff]
        %v836 = vld [vmem:[%s3 + $0x8] sm:$0xff]
        %v837 = vld [vmem:[%s3 + $0x10] sm:$0xff]
        %v838 = vld [vmem:[%s3 + $0x18] sm:$0xff]
        %v839 = vld [vmem:[%s3 + $0x20] sm:$0xff]
        %v840 = vld [vmem:[%s3 + $0x28] sm:$0xff]
        %v841 = vld [vmem:[%s3 + $0x30] sm:$0xff]
        %v842 = vld [vmem:[%s3 + $0x38] sm:$0xff]
        %v843 = vld [vmem:[%s3 + $0x40] sm:$0xff]
        %v844 = vld [vmem:[%s3 + $0x48] sm:$0xff]
        %v845 = vld [vmem:[%s3 + $0x50] sm:$0xff]
        %v846 = vld [vmem:[%s3 + $0x58] sm:$0xff]
        %v847 = vld [vmem:[%s3 + $0x60] sm:$0xff]
        %v848 = vld [vmem:[%s3 + $0x68] sm:$0xff]
        %v849 = vld [vmem:[%s3 + $0x70] sm:$0xff]
        %v850 = vld [vmem:[%s3 + $0x78] sm:$0xff]
        %v851 = vld [vmem:[%s4] sm:$0x1]
        %v853 = vlaneseq
        %v854 = vshrl.u32 %v853, 7
        %v855 = vsub.s32 0, %v854
        %v856 = vrot.slane %v851, %v855
        %858 = vmatprep.subr.mxu0 0.0
        %859 = vmatpush1.msra.mxu0 %v835
        %860 = vmatprep.subr.mxu0 0.0
        %861 = vmatpush1.msra.mxu0 %v836
        %862 = vmatprep.subr.mxu0 0.0
        %863 = vmatpush1.msra.mxu0 %v837
        %864 = vmatprep.subr.mxu0 0.0
        %865 = vmatpush1.msra.mxu0 %v838
        %866 = vmatprep.subr.mxu0 0.0
        %867 = vmatpush1.msra.mxu0 %v839
        %868 = vmatprep.subr.mxu0 0.0
        %869 = vmatpush1.msra.mxu0 %v840
        %870 = vmatprep.subr.mxu0 0.0
        %871 = vmatpush1.msra.mxu0 %v841
        %872 = vmatprep.subr.mxu0 0.0
        %873 = vmatpush1.msra.mxu0 %v842
        %874 = vmatprep.subr.mxu0 0.0
        %875 = vmatpush1.msra.mxu0 %v843
        %876 = vmatprep.subr.mxu0 0.0
        %877 = vmatpush1.msra.mxu0 %v844
        %878 = vmatprep.subr.mxu0 0.0
        %879 = vmatpush1.msra.mxu0 %v845
        %880 = vmatprep.subr.mxu0 0.0
        %881 = vmatpush1.msra.mxu0 %v846
        %882 = vmatprep.subr.mxu0 0.0
        %883 = vmatpush1.msra.mxu0 %v847
        %884 = vmatprep.subr.mxu0 0.0
        %885 = vmatpush1.msra.mxu0 %v848
        %886 = vmatprep.subr.mxu0 0.0
        %887 = vmatpush1.msra.mxu0 %v849
        %888 = vmatprep.subr.mxu0 0.0
        %889 = vmatpush1.msra.mxu0 %v850
        %890 = vmatprep.subr.mxu0 0.0
        %891 = vmatpush1.msra.mxu0 0.0
        %892 = vmatprep.subr.mxu0 0.0
        %893 = vmatpush1.msra.mxu0 0.0
        %894 = vmatprep.subr.mxu0 0.0
        %895 = vmatpush1.msra.mxu0 0.0
        %896 = vmatprep.subr.mxu0 0.0
        %897 = vmatpush1.msra.mxu0 0.0
        %898 = vmatprep.subr.mxu0 0.0
        %899 = vmatpush1.msra.mxu0 0.0
        %900 = vmatprep.subr.mxu0 0.0
        %901 = vmatpush1.msra.mxu0 0.0
        %902 = vmatprep.subr.mxu0 0.0
        %903 = vmatpush1.msra.mxu0 0.0
        %904 = vmatprep.subr.mxu0 0.0
        %905 = vmatpush1.msra.mxu0 0.0
        %906 = vmatprep.subr.mxu0 0.0
        %907 = vmatpush1.msra.mxu0 0.0
        %908 = vmatprep.subr.mxu0 0.0
        %909 = vmatpush1.msra.mxu0 0.0
        %910 = vmatprep.subr.mxu0 0.0
        %911 = vmatpush1.msra.mxu0 0.0
        %912 = vmatprep.subr.mxu0 0.0
        %913 = vmatpush1.msra.mxu0 0.0
        %914 = vmatprep.subr.mxu0 0.0
        %915 = vmatpush1.msra.mxu0 0.0
        %916 = vmatprep.subr.mxu0 0.0
        %917 = vmatpush1.msra.mxu0 0.0
        %918 = vmatprep.subr.mxu0 0.0
        %919 = vmatpush1.msra.mxu0 0.0
        %920 = vmatprep.subr.mxu0 0.0
        %921 = vmatpush1.msra.mxu0 0.0
        %922 = vmatprep.mubr.f32.mxu0 0.0
        %923 = vmatmul.mubr.f32.gmra.mrb[0].mxu0 %v763
        %v924 = vpop.f32.mrb[0].mxu0
        %v925 = vadd.f32 %v856, %v924
        %v926 = vpop.f32.mrb[0].mxu0
        %927 = vmatprep.mubr.f32.mxu0 0.0
        %928 = vmatmul.mubr.f32.gmra.mrb[0].mxu0 %v764
        %v929 = vpop.f32.mrb[0].mxu0
        %v930 = vadd.f32 %v856, %v929
        %v931 = vpop.f32.mrb[0].mxu0
        %932 = vmatprep.mubr.f32.mxu0 0.0
        %933 = vmatmul.mubr.f32.gmra.mrb[0].mxu0 %v765
        %v934 = vpop.f32.mrb[0].mxu0
        %v935 = vadd.f32 %v856, %v934
        %v936 = vpop.f32.mrb[0].mxu0
        %937 = vmatprep.mubr.f32.mxu0 0.0
        %938 = vmatmul.mubr.f32.gmra.mrb[0].mxu0 %v766
        %v939 = vpop.f32.mrb[0].mxu0
        %v940 = vadd.f32 %v856, %v939
        %v941 = vpop.f32.mrb[0].mxu0
        %942 = vmatprep.mubr.f32.mxu0 0.0
        %943 = vmatmul.mubr.f32.gmra.mrb[0].mxu0 %v767
        %v944 = vpop.f32.mrb[0].mxu0
        %v945 = vadd.f32 %v856, %v944
        %v946 = vpop.f32.mrb[0].mxu0
        %947 = vmatprep.mubr.f32.mxu0 0.0
        %948 = vmatmul.mubr.f32.gmra.mrb[0].mxu0 %v768
        %v949 = vpop.f32.mrb[0].mxu0
        %v950 = vadd.f32 %v856, %v949
        %v951 = vpop.f32.mrb[0].mxu0
        %952 = vmatprep.mubr.f32.mxu0 0.0
        %953 = vmatmul.mubr.f32.gmra.mrb[0].mxu0 %v769
        %v954 = vpop.f32.mrb[0].mxu0
        %v955 = vadd.f32 %v856, %v954
        %v956 = vpop.f32.mrb[0].mxu0
        %957 = vmatprep.mubr.f32.mxu0 0.0
        %958 = vmatmul.mubr.f32.gmra.mrb[0].mxu0 %v770
        %v959 = vpop.f32.mrb[0].mxu0
        %v960 = vadd.f32 %v856, %v959
        %v961 = vpop.f32.mrb[0].mxu0
        %962 = vmatprep.mubr.f32.mxu0 0.0
        %963 = vmatmul.mubr.f32.gmra.mrb[0].mxu0 %v771
        %v964 = vpop.f32.mrb[0].mxu0
        %v965 = vadd.f32 %v856, %v964
        %v966 = vpop.f32.mrb[0].mxu0
        %967 = vmatprep.mubr.f32.mxu0 0.0
        %968 = vmatmul.mubr.f32.gmra.mrb[0].mxu0 %v772
        %v969 = vpop.f32.mrb[0].mxu0
        %v970 = vadd.f32 %v856, %v969
        %v971 = vpop.f32.mrb[0].mxu0
        %972 = vmatprep.mubr.f32.mxu0 0.0
        %973 = vmatmul.mubr.f32.gmra.mrb[0].mxu0 %v773
        %v974 = vpop.f32.mrb[0].mxu0
        %v975 = vadd.f32 %v856, %v974
        %v976 = vpop.f32.mrb[0].mxu0
        %977 = vmatprep.mubr.f32.mxu0 0.0
        %978 = vmatmul.mubr.f32.gmra.mrb[0].mxu0 %v774
        %v979 = vpop.f32.mrb[0].mxu0
        %v980 = vadd.f32 %v856, %v979
        %v981 = vpop.f32.mrb[0].mxu0
        %982 = vmatprep.mubr.f32.mxu0 0.0
        %983 = vmatmul.mubr.f32.gmra.mrb[0].mxu0 %v775
        %v984 = vpop.f32.mrb[0].mxu0
        %v985 = vadd.f32 %v856, %v984
        %v986 = vpop.f32.mrb[0].mxu0
        %987 = vmatprep.mubr.f32.mxu0 0.0
        %988 = vmatmul.mubr.f32.gmra.mrb[0].mxu0 %v776
        %v989 = vpop.f32.mrb[0].mxu0
        %v990 = vadd.f32 %v856, %v989
        %v991 = vpop.f32.mrb[0].mxu0
        %992 = vmatprep.mubr.f32.mxu0 0.0
        %993 = vmatmul.mubr.f32.gmra.mrb[0].mxu0 %v777
        %v994 = vpop.f32.mrb[0].mxu0
        %v995 = vadd.f32 %v856, %v994
        %v996 = vpop.f32.mrb[0].mxu0
        %997 = vmatprep.mubr.f32.mxu0 0.0
        %998 = vmatmul.mubr.f32.gmra.mrb[0].mxu0 %v778
        %v999 = vpop.f32.mrb[0].mxu0
        %v1000 = vadd.f32 %v856, %v999
        %v1001 = vpop.f32.mrb[0].mxu0
        %1002 = vmatprep.mubr.f32.mxu0 0.0
        %1003 = vmatmul.mubr.f32.gmra.mrb[0].mxu0 %v779
        %v1004 = vpop.f32.mrb[0].mxu0
        %v1005 = vadd.f32 %v856, %v1004
        %v1006 = vpop.f32.mrb[0].mxu0
        %1007 = vmatprep.mubr.f32.mxu0 0.0
        %1008 = vmatmul.mubr.f32.gmra.mrb[0].mxu0 %v780
        %v1009 = vpop.f32.mrb[0].mxu0
        %v1010 = vadd.f32 %v856, %v1009
        %v1011 = vpop.f32.mrb[0].mxu0
        %1012 = vmatprep.mubr.f32.mxu0 0.0
        %1013 = vmatmul.mubr.f32.gmra.mrb[0].mxu0 %v781
        %v1014 = vpop.f32.mrb[0].mxu0
        %v1015 = vadd.f32 %v856, %v1014
        %v1016 = vpop.f32.mrb[0].mxu0
        %1017 = vmatprep.mubr.f32.mxu0 0.0
        %1018 = vmatmul.mubr.f32.gmra.mrb[0].mxu0 %v782
        %v1019 = vpop.f32.mrb[0].mxu0
        %v1020 = vadd.f32 %v856, %v1019
        %v1021 = vpop.f32.mrb[0].mxu0
        %1022 = vmatprep.mubr.f32.mxu0 0.0
        %1023 = vmatmul.mubr.f32.gmra.mrb[0].mxu0 %v783
        %v1024 = vpop.f32.mrb[0].mxu0
        %v1025 = vadd.f32 %v856, %v1024
        %v1026 = vpop.f32.mrb[0].mxu0
        %1027 = vmatprep.mubr.f32.mxu0 0.0
        %1028 = vmatmul.mubr.f32.gmra.mrb[0].mxu0 %v784
        %v1029 = vpop.f32.mrb[0].mxu0
        %v1030 = vadd.f32 %v856, %v1029
        %v1031 = vpop.f32.mrb[0].mxu0
        %1032 = vmatprep.mubr.f32.mxu0 0.0
        %1033 = vmatmul.mubr.f32.gmra.mrb[0].mxu0 %v785
        %v1034 = vpop.f32.mrb[0].mxu0
        %v1035 = vadd.f32 %v856, %v1034
        %v1036 = vpop.f32.mrb[0].mxu0
        %1037 = vmatprep.mubr.f32.mxu0 0.0
        %1038 = vmatmul.mubr.f32.gmra.mrb[0].mxu0 %v786
        %v1039 = vpop.f32.mrb[0].mxu0
        %v1040 = vadd.f32 %v856, %v1039
        %v1041 = vpop.f32.mrb[0].mxu0
        %1042 = vmatprep.mubr.f32.mxu0 0.0
        %1043 = vmatmul.mubr.f32.gmra.mrb[0].mxu0 %v787
        %v1044 = vpop.f32.mrb[0].mxu0
        %v1045 = vadd.f32 %v856, %v1044
        %v1046 = vpop.f32.mrb[0].mxu0
        %1047 = vmatprep.mubr.f32.mxu0 0.0
        %1048 = vmatmul.mubr.f32.gmra.mrb[0].mxu0 %v788
        %v1049 = vpop.f32.mrb[0].mxu0
        %v1050 = vadd.f32 %v856, %v1049
        %v1051 = vpop.f32.mrb[0].mxu0
        %1052 = vmatprep.mubr.f32.mxu0 0.0
        %1053 = vmatmul.mubr.f32.gmra.mrb[0].mxu0 %v789
        %v1054 = vpop.f32.mrb[0].mxu0
        %v1055 = vadd.f32 %v856, %v1054
        %v1056 = vpop.f32.mrb[0].mxu0
        %1057 = vmatprep.mubr.f32.mxu0 0.0
        %1058 = vmatmul.mubr.f32.gmra.mrb[0].mxu0 %v790
        %v1059 = vpop.f32.mrb[0].mxu0
        %v1060 = vadd.f32 %v856, %v1059
        %v1061 = vpop.f32.mrb[0].mxu0
        %1062 = vmatprep.mubr.f32.mxu0 0.0
        %1063 = vmatmul.mubr.f32.gmra.mrb[0].mxu0 %v791
        %v1064 = vpop.f32.mrb[0].mxu0
        %v1065 = vadd.f32 %v856, %v1064
        %v1066 = vpop.f32.mrb[0].mxu0
        %1067 = vmatprep.mubr.f32.mxu0 0.0
        %1068 = vmatmul.mubr.f32.gmra.mrb[0].mxu0 %v792
        %v1069 = vpop.f32.mrb[0].mxu0
        %v1070 = vadd.f32 %v856, %v1069
        %v1071 = vpop.f32.mrb[0].mxu0
        %1072 = vmatprep.mubr.f32.mxu0 0.0
        %1073 = vmatmul.mubr.f32.gmra.mrb[0].mxu0 %v793
        %v1074 = vpop.f32.mrb[0].mxu0
        %v1075 = vadd.f32 %v856, %v1074
        %v1076 = vpop.f32.mrb[0].mxu0
        %1077 = vmatprep.mubr.f32.mxu0 0.0
        %1078 = vmatmul.mubr.f32.gmra.mrb[0].mxu0 %v794
        %v1079 = vpop.f32.mrb[0].mxu0
        %v1080 = vadd.f32 %v856, %v1079
        %v1081 = vpop.f32.mrb[0].mxu0
        %1082 = vdwg.mxu0
        %v1083 = vmax.f32 %v925, 0.0
        %v1084 = vmax.f32 %v930, 0.0
        %v1085 = vmax.f32 %v935, 0.0
        %v1086 = vmax.f32 %v940, 0.0
        %v1087 = vmax.f32 %v945, 0.0
        %v1088 = vmax.f32 %v950, 0.0
        %v1089 = vmax.f32 %v955, 0.0
        %v1090 = vmax.f32 %v960, 0.0
        %v1091 = vmax.f32 %v965, 0.0
        %v1092 = vmax.f32 %v970, 0.0
        %v1093 = vmax.f32 %v975, 0.0
        %v1094 = vmax.f32 %v980, 0.0
        %v1095 = vmax.f32 %v985, 0.0
        %v1096 = vmax.f32 %v990, 0.0
        %v1097 = vmax.f32 %v995, 0.0
        %v1098 = vmax.f32 %v1000, 0.0
        %v1099 = vmax.f32 %v1005, 0.0
        %v1100 = vmax.f32 %v1010, 0.0
        %v1101 = vmax.f32 %v1015, 0.0
        %v1102 = vmax.f32 %v1020, 0.0
        %v1103 = vmax.f32 %v1025, 0.0
        %v1104 = vmax.f32 %v1030, 0.0
        %v1105 = vmax.f32 %v1035, 0.0
        %v1106 = vmax.f32 %v1040, 0.0
        %v1107 = vmax.f32 %v1045, 0.0
        %v1108 = vmax.f32 %v1050, 0.0
        %v1109 = vmax.f32 %v1055, 0.0
        %v1110 = vmax.f32 %v1060, 0.0
        %v1111 = vmax.f32 %v1065, 0.0
        %v1112 = vmax.f32 %v1070, 0.0
        %v1113 = vmax.f32 %v1075, 0.0
        %v1114 = vmax.f32 %v1080, 0.0
        %v1115 = vmax.f32 %v1083, %v1087
        %v1116 = vmax.f32 %v1084, %v1088
        %v1117 = vmax.f32 %v1085, %v1089
        %v1118 = vmax.f32 %v1086, %v1090
        %v1119 = vmax.f32 %v1115, %v1091
        %v1120 = vmax.f32 %v1116, %v1092
        %v1121 = vmax.f32 %v1117, %v1093
        %v1122 = vmax.f32 %v1118, %v1094
        %v1123 = vmax.f32 %v1119, %v1095
        %v1124 = vmax.f32 %v1120, %v1096
        %v1125 = vmax.f32 %v1121, %v1097
        %v1126 = vmax.f32 %v1122, %v1098
        %v1127 = vmax.f32 %v1123, %v1099
        %v1128 = vmax.f32 %v1124, %v1100
        %v1129 = vmax.f32 %v1125, %v1101
        %v1130 = vmax.f32 %v1126, %v1102
        %v1131 = vmax.f32 %v1127, %v1103
        %v1132 = vmax.f32 %v1128, %v1104
        %v1133 = vmax.f32 %v1129, %v1105
        %v1134 = vmax.f32 %v1130, %v1106
        %v1135 = vmax.f32 %v1131, %v1107
        %v1136 = vmax.f32 %v1132, %v1108
        %v1137 = vmax.f32 %v1133, %v1109
        %v1138 = vmax.f32 %v1134, %v1110
        %v1139 = vmax.f32 %v1135, %v1111
        %v1140 = vmax.f32 %v1136, %v1112
        %v1141 = vmax.f32 %v1137, %v1113
        %v1142 = vmax.f32 %v1138, %v1114
        %v1143 = vmax.f32 %v1139, %v1140
        %v1144 = vmax.f32 %v1141, %v1142
        %v1145 = vmax.f32 %v1143, %v1144
        %v1146 = vrot.slane %v1145, 4
        %v1147 = vmax.f32 %v1145, %v1146
        %v1148 = vrot.slane %v1147, 2
        %v1149 = vmax.f32 %v1147, %v1148
        %v1150 = vrot.slane %v1149, 1
        %v1151 = vmax.f32 %v1149, %v1150
        %v1152 = vld [vmem:[%s370] sm:$0x1]
        %v1153 = vmax.f32 %v1152, %v1151
        %1154 = vst [vmem:[%s370] sm:$0x1] %v1153
        %v1155 = vld [vmem:[%s5] sm:$0xff]
        %v1156 = vld [vmem:[%s5 + $0x8] sm:$0xff]
        %v1157 = vld [vmem:[%s5 + $0x10] sm:$0xff]
        %v1158 = vld [vmem:[%s5 + $0x18] sm:$0xff]
        %v1159 = vld [vmem:[%s5 + $0x20] sm:$0xff]
        %v1160 = vld [vmem:[%s5 + $0x28] sm:$0xff]
        %v1161 = vld [vmem:[%s5 + $0x30] sm:$0xff]
        %v1162 = vld [vmem:[%s5 + $0x38] sm:$0xff]
        %v1163 = vld [vmem:[%s5 + $0x40] sm:$0xff]
        %v1164 = vld [vmem:[%s5 + $0x48] sm:$0xff]
        %v1165 = vld [vmem:[%s5 + $0x50] sm:$0xff]
        %v1166 = vld [vmem:[%s5 + $0x58] sm:$0xff]
        %v1167 = vld [vmem:[%s5 + $0x60] sm:$0xff]
        %v1168 = vld [vmem:[%s5 + $0x68] sm:$0xff]
        %v1169 = vld [vmem:[%s5 + $0x70] sm:$0xff]
        %v1170 = vld [vmem:[%s5 + $0x78] sm:$0xff]
        %v1171 = vld [vmem:[%s6] sm:$0x1]
        %v1173 = vlaneseq
        %v1174 = vshrl.u32 %v1173, 7
        %v1175 = vsub.s32 0, %v1174
        %v1176 = vrot.slane %v1171, %v1175
        %1178 = vmatprep.subr.mxu0 0.0
        %1179 = vmatpush1.msra.mxu0 %v1155
        %1180 = vmatprep.subr.mxu0 0.0
        %1181 = vmatpush1.msra.mxu0 %v1156
        %1182 = vmatprep.subr.mxu0 0.0
        %1183 = vmatpush1.msra.mxu0 %v1157
        %1184 = vmatprep.subr.mxu0 0.0
        %1185 = vmatpush1.msra.mxu0 %v1158
        %1186 = vmatprep.subr.mxu0 0.0
        %1187 = vmatpush1.msra.mxu0 %v1159
        %1188 = vmatprep.subr.mxu0 0.0
        %1189 = vmatpush1.msra.mxu0 %v1160
        %1190 = vmatprep.subr.mxu0 0.0
        %1191 = vmatpush1.msra.mxu0 %v1161
        %1192 = vmatprep.subr.mxu0 0.0
        %1193 = vmatpush1.msra.mxu0 %v1162
        %1194 = vmatprep.subr.mxu0 0.0
        %1195 = vmatpush1.msra.mxu0 %v1163
        %1196 = vmatprep.subr.mxu0 0.0
        %1197 = vmatpush1.msra.mxu0 %v1164
        %1198 = vmatprep.subr.mxu0 0.0
        %1199 = vmatpush1.msra.mxu0 %v1165
        %1200 = vmatprep.subr.mxu0 0.0
        %1201 = vmatpush1.msra.mxu0 %v1166
        %1202 = vmatprep.subr.mxu0 0.0
        %1203 = vmatpush1.msra.mxu0 %v1167
        %1204 = vmatprep.subr.mxu0 0.0
        %1205 = vmatpush1.msra.mxu0 %v1168
        %1206 = vmatprep.subr.mxu0 0.0
        %1207 = vmatpush1.msra.mxu0 %v1169
        %1208 = vmatprep.subr.mxu0 0.0
        %1209 = vmatpush1.msra.mxu0 %v1170
        %1210 = vmatprep.subr.mxu0 0.0
        %1211 = vmatpush1.msra.mxu0 0.0
        %1212 = vmatprep.subr.mxu0 0.0
        %1213 = vmatpush1.msra.mxu0 0.0
        %1214 = vmatprep.subr.mxu0 0.0
        %1215 = vmatpush1.msra.mxu0 0.0
        %1216 = vmatprep.subr.mxu0 0.0
        %1217 = vmatpush1.msra.mxu0 0.0
        %1218 = vmatprep.subr.mxu0 0.0
        %1219 = vmatpush1.msra.mxu0 0.0
        %1220 = vmatprep.subr.mxu0 0.0
        %1221 = vmatpush1.msra.mxu0 0.0
        %1222 = vmatprep.subr.mxu0 0.0
        %1223 = vmatpush1.msra.mxu0 0.0
        %1224 = vmatprep.subr.mxu0 0.0
        %1225 = vmatpush1.msra.mxu0 0.0
        %1226 = vmatprep.subr.mxu0 0.0
        %1227 = vmatpush1.msra.mxu0 0.0
        %1228 = vmatprep.subr.mxu0 0.0
        %1229 = vmatpush1.msra.mxu0 0.0
        %1230 = vmatprep.subr.mxu0 0.0
        %1231 = vmatpush1.msra.mxu0 0.0
        %1232 = vmatprep.subr.mxu0 0.0
        %1233 = vmatpush1.msra.mxu0 0.0
        %1234 = vmatprep.subr.mxu0 0.0
        %1235 = vmatpush1.msra.mxu0 0.0
        %1236 = vmatprep.subr.mxu0 0.0
        %1237 = vmatpush1.msra.mxu0 0.0
        %1238 = vmatprep.subr.mxu0 0.0
        %1239 = vmatpush1.msra.mxu0 0.0
        %1240 = vmatprep.subr.mxu0 0.0
        %1241 = vmatpush1.msra.mxu0 0.0
        %1242 = vmatprep.mubr.f32.mxu0 0.0
        %1243 = vmatmul.mubr.f32.gmra.mrb[0].mxu0 %v1083
        %v1244 = vpop.f32.mrb[0].mxu0
        %v1245 = vadd.f32 %v1176, %v1244
        %v1246 = vpop.f32.mrb[0].mxu0
        %1247 = vmatprep.mubr.f32.mxu0 0.0
        %1248 = vmatmul.mubr.f32.gmra.mrb[0].mxu0 %v1084
        %v1249 = vpop.f32.mrb[0].mxu0
        %v1250 = vadd.f32 %v1176, %v1249
        %v1251 = vpop.f32.mrb[0].mxu0
        %1252 = vmatprep.mubr.f32.mxu0 0.0
        %1253 = vmatmul.mubr.f32.gmra.mrb[0].mxu0 %v1085
        %v1254 = vpop.f32.mrb[0].mxu0
        %v1255 = vadd.f32 %v1176, %v1254
        %v1256 = vpop.f32.mrb[0].mxu0
        %1257 = vmatprep.mubr.f32.mxu0 0.0
        %1258 = vmatmul.mubr.f32.gmra.mrb[0].mxu0 %v1086
        %v1259 = vpop.f32.mrb[0].mxu0
        %v1260 = vadd.f32 %v1176, %v1259
        %v1261 = vpop.f32.mrb[0].mxu0
        %1262 = vmatprep.mubr.f32.mxu0 0.0
        %1263 = vmatmul.mubr.f32.gmra.mrb[0].mxu0 %v1087
        %v1264 = vpop.f32.mrb[0].mxu0
        %v1265 = vadd.f32 %v1176, %v1264
        %v1266 = vpop.f32.mrb[0].mxu0
        %1267 = vmatprep.mubr.f32.mxu0 0.0
        %1268 = vmatmul.mubr.f32.gmra.mrb[0].mxu0 %v1088
        %v1269 = vpop.f32.mrb[0].mxu0
        %v1270 = vadd.f32 %v1176, %v1269
        %v1271 = vpop.f32.mrb[0].mxu0
        %1272 = vmatprep.mubr.f32.mxu0 0.0
        %1273 = vmatmul.mubr.f32.gmra.mrb[0].mxu0 %v1089
        %v1274 = vpop.f32.mrb[0].mxu0
        %v1275 = vadd.f32 %v1176, %v1274
        %v1276 = vpop.f32.mrb[0].mxu0
        %1277 = vmatprep.mubr.f32.mxu0 0.0
        %1278 = vmatmul.mubr.f32.gmra.mrb[0].mxu0 %v1090
        %v1279 = vpop.f32.mrb[0].mxu0
        %v1280 = vadd.f32 %v1176, %v1279
        %v1281 = vpop.f32.mrb[0].mxu0
        %1282 = vmatprep.mubr.f32.mxu0 0.0
        %1283 = vmatmul.mubr.f32.gmra.mrb[0].mxu0 %v1091
        %v1284 = vpop.f32.mrb[0].mxu0
        %v1285 = vadd.f32 %v1176, %v1284
        %v1286 = vpop.f32.mrb[0].mxu0
        %1287 = vmatprep.mubr.f32.mxu0 0.0
        %1288 = vmatmul.mubr.f32.gmra.mrb[0].mxu0 %v1092
        %v1289 = vpop.f32.mrb[0].mxu0
        %v1290 = vadd.f32 %v1176, %v1289
        %v1291 = vpop.f32.mrb[0].mxu0
        %1292 = vmatprep.mubr.f32.mxu0 0.0
        %1293 = vmatmul.mubr.f32.gmra.mrb[0].mxu0 %v1093
        %v1294 = vpop.f32.mrb[0].mxu0
        %v1295 = vadd.f32 %v1176, %v1294
        %v1296 = vpop.f32.mrb[0].mxu0
        %1297 = vmatprep.mubr.f32.mxu0 0.0
        %1298 = vmatmul.mubr.f32.gmra.mrb[0].mxu0 %v1094
        %v1299 = vpop.f32.mrb[0].mxu0
        %v1300 = vadd.f32 %v1176, %v1299
        %v1301 = vpop.f32.mrb[0].mxu0
        %1302 = vmatprep.mubr.f32.mxu0 0.0
        %1303 = vmatmul.mubr.f32.gmra.mrb[0].mxu0 %v1095
        %v1304 = vpop.f32.mrb[0].mxu0
        %v1305 = vadd.f32 %v1176, %v1304
        %v1306 = vpop.f32.mrb[0].mxu0
        %1307 = vmatprep.mubr.f32.mxu0 0.0
        %1308 = vmatmul.mubr.f32.gmra.mrb[0].mxu0 %v1096
        %v1309 = vpop.f32.mrb[0].mxu0
        %v1310 = vadd.f32 %v1176, %v1309
        %v1311 = vpop.f32.mrb[0].mxu0
        %1312 = vmatprep.mubr.f32.mxu0 0.0
        %1313 = vmatmul.mubr.f32.gmra.mrb[0].mxu0 %v1097
        %v1314 = vpop.f32.mrb[0].mxu0
        %v1315 = vadd.f32 %v1176, %v1314
        %v1316 = vpop.f32.mrb[0].mxu0
        %1317 = vmatprep.mubr.f32.mxu0 0.0
        %1318 = vmatmul.mubr.f32.gmra.mrb[0].mxu0 %v1098
        %v1319 = vpop.f32.mrb[0].mxu0
        %v1320 = vadd.f32 %v1176, %v1319
        %v1321 = vpop.f32.mrb[0].mxu0
        %1322 = vmatprep.mubr.f32.mxu0 0.0
        %1323 = vmatmul.mubr.f32.gmra.mrb[0].mxu0 %v1099
        %v1324 = vpop.f32.mrb[0].mxu0
        %v1325 = vadd.f32 %v1176, %v1324
        %v1326 = vpop.f32.mrb[0].mxu0
        %1327 = vmatprep.mubr.f32.mxu0 0.0
        %1328 = vmatmul.mubr.f32.gmra.mrb[0].mxu0 %v1100
        %v1329 = vpop.f32.mrb[0].mxu0
        %v1330 = vadd.f32 %v1176, %v1329
        %v1331 = vpop.f32.mrb[0].mxu0
        %1332 = vmatprep.mubr.f32.mxu0 0.0
        %1333 = vmatmul.mubr.f32.gmra.mrb[0].mxu0 %v1101
        %v1334 = vpop.f32.mrb[0].mxu0
        %v1335 = vadd.f32 %v1176, %v1334
        %v1336 = vpop.f32.mrb[0].mxu0
        %1337 = vmatprep.mubr.f32.mxu0 0.0
        %1338 = vmatmul.mubr.f32.gmra.mrb[0].mxu0 %v1102
        %v1339 = vpop.f32.mrb[0].mxu0
        %v1340 = vadd.f32 %v1176, %v1339
        %v1341 = vpop.f32.mrb[0].mxu0
        %1342 = vmatprep.mubr.f32.mxu0 0.0
        %1343 = vmatmul.mubr.f32.gmra.mrb[0].mxu0 %v1103
        %v1344 = vpop.f32.mrb[0].mxu0
        %v1345 = vadd.f32 %v1176, %v1344
        %v1346 = vpop.f32.mrb[0].mxu0
        %1347 = vmatprep.mubr.f32.mxu0 0.0
        %1348 = vmatmul.mubr.f32.gmra.mrb[0].mxu0 %v1104
        %v1349 = vpop.f32.mrb[0].mxu0
        %v1350 = vadd.f32 %v1176, %v1349
        %v1351 = vpop.f32.mrb[0].mxu0
        %1352 = vmatprep.mubr.f32.mxu0 0.0
        %1353 = vmatmul.mubr.f32.gmra.mrb[0].mxu0 %v1105
        %v1354 = vpop.f32.mrb[0].mxu0
        %v1355 = vadd.f32 %v1176, %v1354
        %v1356 = vpop.f32.mrb[0].mxu0
        %1357 = vmatprep.mubr.f32.mxu0 0.0
        %1358 = vmatmul.mubr.f32.gmra.mrb[0].mxu0 %v1106
        %v1359 = vpop.f32.mrb[0].mxu0
        %v1360 = vadd.f32 %v1176, %v1359
        %v1361 = vpop.f32.mrb[0].mxu0
        %1362 = vmatprep.mubr.f32.mxu0 0.0
        %1363 = vmatmul.mubr.f32.gmra.mrb[0].mxu0 %v1107
        %v1364 = vpop.f32.mrb[0].mxu0
        %v1365 = vadd.f32 %v1176, %v1364
        %v1366 = vpop.f32.mrb[0].mxu0
        %1367 = vmatprep.mubr.f32.mxu0 0.0
        %1368 = vmatmul.mubr.f32.gmra.mrb[0].mxu0 %v1108
        %v1369 = vpop.f32.mrb[0].mxu0
        %v1370 = vadd.f32 %v1176, %v1369
        %v1371 = vpop.f32.mrb[0].mxu0
        %1372 = vmatprep.mubr.f32.mxu0 0.0
        %1373 = vmatmul.mubr.f32.gmra.mrb[0].mxu0 %v1109
        %v1374 = vpop.f32.mrb[0].mxu0
        %v1375 = vadd.f32 %v1176, %v1374
        %v1376 = vpop.f32.mrb[0].mxu0
        %1377 = vmatprep.mubr.f32.mxu0 0.0
        %1378 = vmatmul.mubr.f32.gmra.mrb[0].mxu0 %v1110
        %v1379 = vpop.f32.mrb[0].mxu0
        %v1380 = vadd.f32 %v1176, %v1379
        %v1381 = vpop.f32.mrb[0].mxu0
        %1382 = vmatprep.mubr.f32.mxu0 0.0
        %1383 = vmatmul.mubr.f32.gmra.mrb[0].mxu0 %v1111
        %v1384 = vpop.f32.mrb[0].mxu0
        %v1385 = vadd.f32 %v1176, %v1384
        %v1386 = vpop.f32.mrb[0].mxu0
        %1387 = vmatprep.mubr.f32.mxu0 0.0
        %1388 = vmatmul.mubr.f32.gmra.mrb[0].mxu0 %v1112
        %v1389 = vpop.f32.mrb[0].mxu0
        %v1390 = vadd.f32 %v1176, %v1389
        %v1391 = vpop.f32.mrb[0].mxu0
        %1392 = vmatprep.mubr.f32.mxu0 0.0
        %1393 = vmatmul.mubr.f32.gmra.mrb[0].mxu0 %v1113
        %v1394 = vpop.f32.mrb[0].mxu0
        %v1395 = vadd.f32 %v1176, %v1394
        %v1396 = vpop.f32.mrb[0].mxu0
        %1397 = vmatprep.mubr.f32.mxu0 0.0
        %1398 = vmatmul.mubr.f32.gmra.mrb[0].mxu0 %v1114
        %v1399 = vpop.f32.mrb[0].mxu0
        %v1400 = vadd.f32 %v1176, %v1399
        %v1401 = vpop.f32.mrb[0].mxu0
        %1402 = vdwg.mxu0
        %v1403 = vmax.f32 %v1245, %v1265
        %v1404 = vmax.f32 %v1250, %v1270
        %v1405 = vmax.f32 %v1255, %v1275
        %v1406 = vmax.f32 %v1260, %v1280
        %v1407 = vmax.f32 %v1403, %v1285
        %v1408 = vmax.f32 %v1404, %v1290
        %v1409 = vmax.f32 %v1405, %v1295
        %v1410 = vmax.f32 %v1406, %v1300
        %v1411 = vmax.f32 %v1407, %v1305
        %v1412 = vmax.f32 %v1408, %v1310
        %v1413 = vmax.f32 %v1409, %v1315
        %v1414 = vmax.f32 %v1410, %v1320
        %v1415 = vmax.f32 %v1411, %v1325
        %v1416 = vmax.f32 %v1412, %v1330
        %v1417 = vmax.f32 %v1413, %v1335
        %v1418 = vmax.f32 %v1414, %v1340
        %v1419 = vmax.f32 %v1415, %v1345
        %v1420 = vmax.f32 %v1416, %v1350
        %v1421 = vmax.f32 %v1417, %v1355
        %v1422 = vmax.f32 %v1418, %v1360
        %v1423 = vmax.f32 %v1419, %v1365
        %v1424 = vmax.f32 %v1420, %v1370
        %v1425 = vmax.f32 %v1421, %v1375
        %v1426 = vmax.f32 %v1422, %v1380
        %v1427 = vmax.f32 %v1423, %v1385
        %v1428 = vmax.f32 %v1424, %v1390
        %v1429 = vmax.f32 %v1425, %v1395
        %v1430 = vmax.f32 %v1426, %v1400
        %v1431 = vmax.f32 %v1427, %v1428
        %v1432 = vmax.f32 %v1429, %v1430
        %v1433 = vmax.f32 %v1431, %v1432
        %v1434 = vrot.slane %v1433, 4
        %v1435 = vmax.f32 %v1433, %v1434
        %v1436 = vrot.slane %v1435, 2
        %v1437 = vmax.f32 %v1435, %v1436
        %v1438 = vrot.slane %v1437, 1
        %v1439 = vmax.f32 %v1437, %v1438
        %v1440 = vld [vmem:[%s376] sm:$0x1]
        %v1441 = vmax.f32 %v1440, %v1439
        %1442 = vst [vmem:[%s376] sm:$0x1] %v1441
        %s1443 = sand.u32 %s212, 1
        %s1444 = scalar_lea.sflag [#allocation3], %s1443
        %s1445 = sand.u32 %s212, 1
        %s1446 = scalar_lea.vmem [#allocation2], %s1445
        %s1447 = sand.u32 %s27, 1
        %s1448 = scalar_lea.sflag [#allocation5], %s1447
        %s1449 = sand.u32 %s240, 1
        %s1450 = scalar_lea.vmem [#allocation4], %s1449
        %s1451 = sand.u32 %s27, 1
        %s1452 = scalar_lea.sflag [#allocation5], %s1451
        %s1453 = sand.u32 %s268, 1
        %s1454 = scalar_lea.vmem [#allocation6], %s1453
        // Predicated region
        $region53: #{tpu_custom_call.1} parent=47 // pred_check
          %p1455 = pneg %p222
        $region54: #{tpu_custom_call.1} parent=47 // pred_check_branch
          %1457 = sbr.rel (%p1455) target = $region56
        $region55: #{tpu_custom_call.1} parent=47 // pred_region
          %s1458 = sadd.s32 %s32, %s33
          %s1460 = ssub.s32 16, 16
          %1461 = vsyncadd %s1444, %s1460
          %s1462 = smul.addr %s1458, 16
          %s1463 = scalar_lea.hbm %s7, %s1462
          %s1465 = sshll.u32 %s1446, 4
          %s1466 = int_to_ptr.vmem [resolvable:$true] %s1465
          %1468 = dma.vmem_to_hbm [thread:$0]  %s1466, 16, %s1463, %s1444
        $region56: #{tpu_custom_call.1} parent=47 // pred_fallthru
          _
        // Predicated region
        $region57: #{tpu_custom_call.1} parent=47 // pred_check
          %p1469 = pneg %p250
        $region58: #{tpu_custom_call.1} parent=47 // pred_check_branch
          %1471 = sbr.rel (%p1469) target = $region60
        $region59: #{tpu_custom_call.1} parent=47 // pred_region
          %s1472 = sadd.s32 %s32, %s33
          %s1474 = ssub.s32 16, 16
          %1475 = vsyncadd %s1448, %s1474
          %s1476 = smul.addr %s1472, 16
          %s1477 = scalar_lea.hbm %s8, %s1476
          %s1479 = sshll.u32 %s1450, 4
          %s1480 = int_to_ptr.vmem [resolvable:$true] %s1479
          %1482 = dma.vmem_to_hbm [thread:$0]  %s1480, 16, %s1477, %s1448
        $region60: #{tpu_custom_call.1} parent=47 // pred_fallthru
          _
        // Predicated region
        $region61: #{tpu_custom_call.1} parent=47 // pred_check
          %p1483 = pneg %p278
        $region62: #{tpu_custom_call.1} parent=47 // pred_check_branch
          %1485 = sbr.rel (%p1483) target = $region64
        $region63: #{tpu_custom_call.1} parent=47 // pred_region
          %s1486 = sadd.s32 %s32, %s33
          %s1488 = ssub.s32 16, 16
          %1489 = vsyncadd %s1452, %s1488
          %s1490 = smul.addr %s1486, 16
          %s1491 = scalar_lea.hbm %s9, %s1490
          %s1493 = sshll.u32 %s1454, 4
          %s1494 = int_to_ptr.vmem [resolvable:$true] %s1493
          %1496 = dma.vmem_to_hbm [thread:$0]  %s1494, 16, %s1491, %s1452
        $region64: #{tpu_custom_call.1} parent=47 // pred_fallthru
          _
      $region48: #{tpu_custom_call.1} parent=5 // pred_fallthru
        _
      %p1497 = scmp.le.s32.totalorder 2, %s22
      // Predicated region
      $region65: #{tpu_custom_call.1} parent=5 // pred_check
        %p1498 = pneg %p1497
      $region66: #{tpu_custom_call.1} parent=5 // pred_check_branch
        %1500 = sbr.rel (%p1498) target = $region68
      $region67: #{tpu_custom_call.1} parent=5 // pred_region
        %s1501 = ssub.s32 %s22, 2
        // Predicated region
        $region69: #{tpu_custom_call.1} parent=67 // pred_check
          %p1502 = pneg %p228
        $region70: #{tpu_custom_call.1} parent=67 // pred_check_branch
          %1504 = sbr.rel (%p1502) target = $region72
        $region71: #{tpu_custom_call.1} parent=67 // pred_region
          %s1505 = sand.u32 %s213, 1
          %s1506 = scalar_lea.sflag [#allocation3], %s1505
          %s1507 = sand.u32 %s213, 1
          %s1508 = scalar_lea.vmem [#allocation2], %s1507
          %1509 = dma.done %s1506, 16
        $region72: #{tpu_custom_call.1} parent=67 // pred_fallthru
          _
        // Predicated region
        $region73: #{tpu_custom_call.1} parent=67 // pred_check
          %p1510 = pneg %p256
        $region74: #{tpu_custom_call.1} parent=67 // pred_check_branch
          %1512 = sbr.rel (%p1510) target = $region76
        $region75: #{tpu_custom_call.1} parent=67 // pred_region
          %s1513 = sand.u32 %s28, 1
          %s1514 = scalar_lea.sflag [#allocation5], %s1513
          %s1515 = sand.u32 %s241, 1
          %s1516 = scalar_lea.vmem [#allocation4], %s1515
          %1517 = dma.done %s1514, 16
        $region76: #{tpu_custom_call.1} parent=67 // pred_fallthru
          _
        // Predicated region
        $region77: #{tpu_custom_call.1} parent=67 // pred_check
          %p1518 = pneg %p284
        $region78: #{tpu_custom_call.1} parent=67 // pred_check_branch
          %1520 = sbr.rel (%p1518) target = $region80
        $region79: #{tpu_custom_call.1} parent=67 // pred_region
          %s1521 = sand.u32 %s28, 1
          %s1522 = scalar_lea.sflag [#allocation5], %s1521
          %s1523 = sand.u32 %s269, 1
          %s1524 = scalar_lea.vmem [#allocation6], %s1523
          %1525 = dma.done %s1522, 16
        $region80: #{tpu_custom_call.1} parent=67 // pred_fallthru
          _
      $region68: #{tpu_custom_call.1} parent=5 // pred_fallthru
        _
    $region6: #{tpu_custom_call.1} parent=1 // loop_footer
      %s26 = sadd.s32 1, %s22
    $region7: #{tpu_custom_call.1} parent=1 // loop_footer_branch
      %21 = sbr.rel target = $region3
    $region8: #{tpu_custom_call.1} parent=1 // loop_exit
      _
    %1526 = vsyncpa [#allocation3], 1
    %s1527 = scalar_lea.sflag [#allocation3], 1
    %1528 = vsyncpa %s1527, 1
    %1529 = vsyncpa [#allocation5], 1
    %s1530 = scalar_lea.sflag [#allocation5], 1
    %1531 = vsyncpa %s1530, 1

</llo_original>
